<compile_context>
chip_gen: v7x
topology: tpu7x:2x2x1
jax: 0.10.0
libtpu: 0.0.40
codegen_flags: <defaults>
</compile_context>

<pallas_src>
import math
import functools

import jax
import jax.numpy as jnp
from jax.experimental import pallas as pl
from jax.experimental.pallas import tpu as pltpu


def transformer_block_kernel(
    xq_ref,                       # (tq, E)  query rows / residual stream
    xf_ref,                       # (S, E)   full sequence (for K/V)
    wq_ref, bq_ref,               # (E, E), (1, E)
    wkv_ref, bkv_ref,             # (E, 2E), (1, 2E)   fused K/V projection
    wo_ref, bo_ref,               # (E, E), (1, E)
    g1_ref, beta1_ref,            # (1, E)
    w1_ref, bf1_ref,              # (E, F), (1, F)
    w2_ref, bf2_ref,              # (F, E), (1, E)
    g2_ref, beta2_ref,            # (1, E)
    o_ref,                        # (tq, E)
    *, num_heads: int, eps: float = 1e-5,
):
    in_dtype = xq_ref.dtype
    xq = xq_ref[...]
    xf = xf_ref[...]
    tq, E = xq.shape
    hd = E // num_heads
    scale = 1.0 / math.sqrt(hd)

    # --- projections (MXU, native-dtype operands, f32 accumulation) ---
    q = jnp.dot(xq, wq_ref[...], preferred_element_type=jnp.float32)
    q = (q + bq_ref[...].astype(jnp.float32)) * scale      # fold 1/sqrt(hd) into q
    kv = jnp.dot(xf, wkv_ref[...], preferred_element_type=jnp.float32)
    kv = kv + bkv_ref[...].astype(jnp.float32)

    q = q.astype(in_dtype)
    k = kv[:, :E].astype(in_dtype)
    v = kv[:, E:].astype(in_dtype)

    # --- per-head attention on contiguous lane slices (no (S,H,hd) reshapes) ---
    head_outs = []
    for h in range(num_heads):                              # H is small & static
        lo = h * hd
        qh = q[:, lo:lo + hd]                               # (tq, hd)
        kh = k[:, lo:lo + hd]                               # (S, hd)
        vh = v[:, lo:lo + hd]                               # (S, hd)
        s = jax.lax.dot_general(qh, kh, (((1,), (1,)), ((), ())),
                                preferred_element_type=jnp.float32)  # (tq, S)
        m = jnp.max(s, axis=-1, keepdims=True)
        e = jnp.exp(s - m)
        inv = pl.reciprocal(jnp.sum(e, axis=-1, keepdims=True), approx=True)
        p = (e * inv).astype(in_dtype)
        head_outs.append(
            jnp.dot(p, vh, preferred_element_type=jnp.float32))      # (tq, hd)
    attn = jnp.concatenate(head_outs, axis=-1).astype(in_dtype)      # (tq, E)

    attn_out = jnp.dot(attn, wo_ref[...], preferred_element_type=jnp.float32)
    attn_out = attn_out + bo_ref[...].astype(jnp.float32)

    # --- residual + LayerNorm 1 (f32 statistics) ---
    r1 = xq.astype(jnp.float32) + attn_out
    mu1 = jnp.mean(r1, axis=-1, keepdims=True)
    var1 = jnp.mean((r1 - mu1) ** 2, axis=-1, keepdims=True)
    y1 = (r1 - mu1) * jax.lax.rsqrt(var1 + eps)
    y1 = y1 * g1_ref[...].astype(jnp.float32) + beta1_ref[...].astype(jnp.float32)

    # --- feed-forward (native-dtype MXU operands, f32 accumulation) ---
    y1c = y1.astype(in_dtype)
    h1 = jnp.dot(y1c, w1_ref[...], preferred_element_type=jnp.float32)
    h1 = jnp.maximum(h1 + bf1_ref[...].astype(jnp.float32), 0.0)
    ff = jnp.dot(h1.astype(in_dtype), w2_ref[...], preferred_element_type=jnp.float32)
    ff = ff + bf2_ref[...].astype(jnp.float32)

    # --- residual + LayerNorm 2 ---
    r2 = y1 + ff
    mu2 = jnp.mean(r2, axis=-1, keepdims=True)
    var2 = jnp.mean((r2 - mu2) ** 2, axis=-1, keepdims=True)
    y2 = (r2 - mu2) * jax.lax.rsqrt(var2 + eps)
    y2 = y2 * g2_ref[...].astype(jnp.float32) + beta2_ref[...].astype(jnp.float32)

    o_ref[...] = y2.astype(o_ref.dtype)


def _pick_q_tile(seq_len):
    for t in (256, 128):
        if seq_len % t == 0:
            return t
    return seq_len       # small / ragged sequences: single q tile


def transformer_block(x, params, *, num_heads):
    B, S, E = x.shape
    tq = _pick_q_tile(S)
    n_q = S // tq

    # Fused K/V projection: one (E, 2E) matmul instead of two narrow ones.
    wkv = jnp.concatenate([params['wk'], params['wv']], axis=1)
    bkv = jnp.concatenate([params['bk'], params['bv']], axis=1)

    weight_args = [
        params['wq'], params['bq'], wkv, bkv, params['wo'], params['bo'],
        params['g1'], params['beta1'],
        params['w1'], params['bf1'], params['w2'], params['bf2'],
        params['g2'], params['beta2'],
    ]

    def weight_spec(a):
        shp = a.shape
        return pl.BlockSpec(shp, lambda b, qi, _n=len(shp): (0,) * _n)

    in_specs = [
        # query-tile view of x: batch dim squeezed out of the kernel ref
        pl.BlockSpec((None, tq, E), lambda b, qi: (b, qi, 0)),
        # full-sequence view of x (for K/V), reused across q tiles
        pl.BlockSpec((None, S, E), lambda b, qi: (b, 0, 0)),
    ] + [weight_spec(a) for a in weight_args]

    out_specs = pl.BlockSpec((None, tq, E), lambda b, qi: (b, qi, 0))

    return pl.pallas_call(
        functools.partial(transformer_block_kernel, num_heads=num_heads),
        out_shape=jax.ShapeDtypeStruct((B, S, E), x.dtype),
        grid_spec=pltpu.PrefetchScalarGridSpec(
            num_scalar_prefetch=0,
            grid=(B, n_q),
            in_specs=in_specs,
            out_specs=out_specs,
        ),
        compiler_params=pltpu.CompilerParams(
            dimension_semantics=("parallel", "parallel"),
            vmem_limit_bytes=64 * 1024 * 1024,
        ),
    )(x, x, *weight_args)


def init_params(key, embed_dim, hidden_dim):
    ks = jax.random.split(key, 12)
    scale_e = 1.0 / math.sqrt(embed_dim)
    scale_h = 1.0 / math.sqrt(hidden_dim)

    def lin(kw, kb, fan_in, fan_out, scale):
        # stored as (in, out) so kernel does x @ W + b
        w = jax.random.uniform(kw, (fan_in, fan_out), jnp.float32, -scale, scale)
        b = jax.random.uniform(kb, (1, fan_out), jnp.float32, -scale, scale)
        return w, b

    wq, bq = lin(ks[0], ks[1], embed_dim, embed_dim, scale_e)
    wk, bk = lin(ks[2], ks[3], embed_dim, embed_dim, scale_e)
    wv, bv = lin(ks[4], ks[5], embed_dim, embed_dim, scale_e)
    wo, bo = lin(ks[6], ks[7], embed_dim, embed_dim, scale_e)
    w1, bf1 = lin(ks[8], ks[9], embed_dim, hidden_dim, scale_e)
    w2, bf2 = lin(ks[10], ks[11], hidden_dim, embed_dim, scale_h)

    return dict(
        wq=wq, bq=bq, wk=wk, bk=bk, wv=wv, bv=bv, wo=wo, bo=bo,
        g1=jnp.ones((1, embed_dim), jnp.float32),
        beta1=jnp.zeros((1, embed_dim), jnp.float32),
        w1=w1, bf1=bf1, w2=w2, bf2=bf2,
        g2=jnp.ones((1, embed_dim), jnp.float32),
        beta2=jnp.zeros((1, embed_dim), jnp.float32),
    )


def reference_transformer_block(x, p, *, num_heads, eps=1e-5):
    B, S, E = x.shape
    hd = E // num_heads
    q = x @ p['wq'] + p['bq']
    k = x @ p['wk'] + p['bk']
    v = x @ p['wv'] + p['bv']
    q = q.reshape(B, S, num_heads, hd).transpose(0, 2, 1, 3)
    k = k.reshape(B, S, num_heads, hd).transpose(0, 2, 1, 3)
    v = v.reshape(B, S, num_heads, hd).transpose(0, 2, 1, 3)
    scores = jnp.einsum('bhqd,bhkd->bhqk', q, k) / math.sqrt(hd)
    w = jax.nn.softmax(scores, axis=-1)
    attn = jnp.einsum('bhqk,bhkd->bhqd', w, v).transpose(0, 2, 1, 3).reshape(B, S, E)
    attn = attn @ p['wo'] + p['bo']

    def ln(z, g, b):
        mu = jnp.mean(z, -1, keepdims=True)
        var = jnp.mean((z - mu) ** 2, -1, keepdims=True)
        return (z - mu) * jax.lax.rsqrt(var + eps) * g + b

    y1 = ln(x + attn, p['g1'], p['beta1'])
    ff = jnp.maximum(y1 @ p['w1'] + p['bf1'], 0.0) @ p['w2'] + p['bf2']
    return ln(y1 + ff, p['g2'], p['beta2'])


if __name__ == "__main__":
    batch, seq, embed_dim, num_heads, hidden_dim = 2, 8, 32, 4, 64

    key = jax.random.PRNGKey(0)
    kx, kp = jax.random.split(key)
    x = jax.random.normal(kx, (batch, seq, embed_dim), jnp.float32)
    params = init_params(kp, embed_dim, hidden_dim)

    out = transformer_block(x, params, num_heads=num_heads)
    out = jax.block_until_ready(out)

    ref = reference_transformer_block(x, params, num_heads=num_heads)
    assert out.shape == (batch, seq, embed_dim)
    # tolerance slightly loosened to cover the approximate EUP reciprocal in softmax
    assert jnp.allclose(out, ref, atol=5e-3, rtol=5e-3), "mismatch vs reference"

    print("KERNEL_OK")
</pallas_src>

<mosaic_0001>
module attributes {stable_mosaic.version = 11 : i64} {
  func.func @transformer_block_kernel(%arg0: i32, %arg1: i32, %arg2: memref<1x8x32xf32, #tpu.memory_space<vmem>>, %arg3: memref<1x8x32xf32, #tpu.memory_space<vmem>>, %arg4: memref<32x32xf32, #tpu.memory_space<vmem>>, %arg5: memref<1x32xf32, #tpu.memory_space<vmem>>, %arg6: memref<32x64xf32, #tpu.memory_space<vmem>>, %arg7: memref<1x64xf32, #tpu.memory_space<vmem>>, %arg8: memref<32x32xf32, #tpu.memory_space<vmem>>, %arg9: memref<1x32xf32, #tpu.memory_space<vmem>>, %arg10: memref<1x32xf32, #tpu.memory_space<vmem>>, %arg11: memref<1x32xf32, #tpu.memory_space<vmem>>, %arg12: memref<32x64xf32, #tpu.memory_space<vmem>>, %arg13: memref<1x64xf32, #tpu.memory_space<vmem>>, %arg14: memref<64x32xf32, #tpu.memory_space<vmem>>, %arg15: memref<1x32xf32, #tpu.memory_space<vmem>>, %arg16: memref<1x32xf32, #tpu.memory_space<vmem>>, %arg17: memref<1x32xf32, #tpu.memory_space<vmem>>, %arg18: memref<1x8x32xf32, #tpu.memory_space<vmem>>) attributes {dimension_semantics = [#tpu.dimension_semantics<parallel>, #tpu.dimension_semantics<parallel>], iteration_bounds = array<i64: 2, 1>, scalar_prefetch = 0 : i64, scratch_operands = 0 : i64, tpu.core_type = #tpu.core_type<tc>, window_params = [{transform_indices = @transform_0, window_bounds = array<i64: 1, 8, 32>}, {transform_indices = @transform_1, window_bounds = array<i64: 1, 8, 32>}, {pipeline_mode = #tpu.pipeline_mode<synchronous>, transform_indices = @transform_2, window_bounds = array<i64: 32, 32>}, {pipeline_mode = #tpu.pipeline_mode<synchronous>, transform_indices = @transform_3, window_bounds = array<i64: 1, 32>}, {pipeline_mode = #tpu.pipeline_mode<synchronous>, transform_indices = @transform_4, window_bounds = array<i64: 32, 64>}, {pipeline_mode = #tpu.pipeline_mode<synchronous>, transform_indices = @transform_5, window_bounds = array<i64: 1, 64>}, {pipeline_mode = #tpu.pipeline_mode<synchronous>, transform_indices = @transform_6, window_bounds = array<i64: 32, 32>}, {pipeline_mode = #tpu.pipeline_mode<synchronous>, transform_indices = @transform_7, window_bounds = array<i64: 1, 32>}, {pipeline_mode = #tpu.pipeline_mode<synchronous>, transform_indices = @transform_8, window_bounds = array<i64: 1, 32>}, {pipeline_mode = #tpu.pipeline_mode<synchronous>, transform_indices = @transform_9, window_bounds = array<i64: 1, 32>}, {pipeline_mode = #tpu.pipeline_mode<synchronous>, transform_indices = @transform_10, window_bounds = array<i64: 32, 64>}, {pipeline_mode = #tpu.pipeline_mode<synchronous>, transform_indices = @transform_11, window_bounds = array<i64: 1, 64>}, {pipeline_mode = #tpu.pipeline_mode<synchronous>, transform_indices = @transform_12, window_bounds = array<i64: 64, 32>}, {pipeline_mode = #tpu.pipeline_mode<synchronous>, transform_indices = @transform_13, window_bounds = array<i64: 1, 32>}, {pipeline_mode = #tpu.pipeline_mode<synchronous>, transform_indices = @transform_14, window_bounds = array<i64: 1, 32>}, {pipeline_mode = #tpu.pipeline_mode<synchronous>, transform_indices = @transform_15, window_bounds = array<i64: 1, 32>}, {transform_indices = @transform_16, window_bounds = array<i64: 1, 8, 32>}]} {
    %c0 = arith.constant 0 : index
    %c0_0 = arith.constant 0 : index
    %c0_1 = arith.constant 0 : index
    %0 = vector.load %arg2[%c0, %c0_0, %c0_1] : memref<1x8x32xf32, #tpu.memory_space<vmem>>, vector<1x8x32xf32>
    %1 = vector.shape_cast %0 : vector<1x8x32xf32> to vector<8x32xf32>
    %c0_2 = arith.constant 0 : index
    %c0_3 = arith.constant 0 : index
    %c0_4 = arith.constant 0 : index
    %2 = vector.load %arg3[%c0_2, %c0_3, %c0_4] : memref<1x8x32xf32, #tpu.memory_space<vmem>>, vector<1x8x32xf32>
    %3 = vector.shape_cast %2 : vector<1x8x32xf32> to vector<8x32xf32>
    %c0_5 = arith.constant 0 : index
    %c0_6 = arith.constant 0 : index
    %4 = vector.load %arg4[%c0_5, %c0_6] : memref<32x32xf32, #tpu.memory_space<vmem>>, vector<32x32xf32>
    %cst = arith.constant dense<0.000000e+00> : vector<8x32xf32>
    %5 = tpu.matmul %1, %4, %cst {dimension_numbers = #tpu.dot_dimension_numbers<[1], [0], [0], [1], [0, 0, 1, 1], [], []>} : vector<8x32xf32>, vector<32x32xf32>, vector<8x32xf32> -> vector<8x32xf32>
    %c0_7 = arith.constant 0 : index
    %c0_8 = arith.constant 0 : index
    %6 = vector.load %arg5[%c0_7, %c0_8] : memref<1x32xf32, #tpu.memory_space<vmem>>, vector<1x32xf32>
    %7 = vector.broadcast %6 : vector<1x32xf32> to vector<8x32xf32>
    %8 = arith.addf %5, %7 : vector<8x32xf32>
    %cst_9 = arith.constant 0.353553385 : f32
    %9 = vector.broadcast %cst_9 : f32 to vector<8x32xf32>
    %10 = arith.mulf %8, %9 : vector<8x32xf32>
    %c0_10 = arith.constant 0 : index
    %c0_11 = arith.constant 0 : index
    %11 = vector.load %arg6[%c0_10, %c0_11] : memref<32x64xf32, #tpu.memory_space<vmem>>, vector<32x64xf32>
    %cst_12 = arith.constant dense<0.000000e+00> : vector<8x64xf32>
    %12 = tpu.matmul %3, %11, %cst_12 {dimension_numbers = #tpu.dot_dimension_numbers<[1], [0], [0], [1], [0, 0, 1, 1], [], []>} : vector<8x32xf32>, vector<32x64xf32>, vector<8x64xf32> -> vector<8x64xf32>
    %c0_13 = arith.constant 0 : index
    %c0_14 = arith.constant 0 : index
    %13 = vector.load %arg7[%c0_13, %c0_14] : memref<1x64xf32, #tpu.memory_space<vmem>>, vector<1x64xf32>
    %14 = vector.broadcast %13 : vector<1x64xf32> to vector<8x64xf32>
    %15 = arith.addf %12, %14 : vector<8x64xf32>
    %16 = vector.extract_strided_slice %15 {offsets = [0, 0], sizes = [8, 32], strides = [1, 1]} : vector<8x64xf32> to vector<8x32xf32>
    %17 = vector.extract_strided_slice %15 {offsets = [0, 32], sizes = [8, 32], strides = [1, 1]} : vector<8x64xf32> to vector<8x32xf32>
    %18 = vector.extract_strided_slice %10 {offsets = [0, 0], sizes = [8, 8], strides = [1, 1]} : vector<8x32xf32> to vector<8x8xf32>
    %19 = vector.extract_strided_slice %16 {offsets = [0, 0], sizes = [8, 8], strides = [1, 1]} : vector<8x32xf32> to vector<8x8xf32>
    %20 = vector.extract_strided_slice %17 {offsets = [0, 0], sizes = [8, 8], strides = [1, 1]} : vector<8x32xf32> to vector<8x8xf32>
    %cst_15 = arith.constant dense<0.000000e+00> : vector<8x8xf32>
    %21 = tpu.matmul %18, %19, %cst_15 {dimension_numbers = #tpu.dot_dimension_numbers<[1], [1], [0], [0], [0, 0, 1, 0], [], []>} : vector<8x8xf32>, vector<8x8xf32>, vector<8x8xf32> -> vector<8x8xf32>
    %cst_16 = arith.constant dense<0xFF800000> : vector<8xf32>
    %22 = vector.multi_reduction <maximumf>, %21, %cst_16 [1] : vector<8x8xf32> to vector<8xf32>
    %23 = vector.shape_cast %22 : vector<8xf32> to vector<8x1xf32>
    %24 = vector.broadcast %23 : vector<8x1xf32> to vector<8x8xf32>
    %25 = arith.subf %21, %24 : vector<8x8xf32>
    %26 = math.exp %25 : vector<8x8xf32>
    %cst_17 = arith.constant dense<0.000000e+00> : vector<8xf32>
    %27 = vector.multi_reduction <add>, %26, %cst_17 [1] : vector<8x8xf32> to vector<8xf32>
    %28 = vector.shape_cast %27 : vector<8xf32> to vector<8x1xf32>
    %29 = tpu.reciprocal %28 {approx = true} : vector<8x1xf32> -> vector<8x1xf32>
    %30 = vector.broadcast %29 : vector<8x1xf32> to vector<8x8xf32>
    %31 = arith.mulf %26, %30 : vector<8x8xf32>
    %cst_18 = arith.constant dense<0.000000e+00> : vector<8x8xf32>
    %32 = tpu.matmul %31, %20, %cst_18 {dimension_numbers = #tpu.dot_dimension_numbers<[1], [0], [0], [1], [0, 0, 1, 1], [], []>} : vector<8x8xf32>, vector<8x8xf32>, vector<8x8xf32> -> vector<8x8xf32>
    %33 = vector.extract_strided_slice %10 {offsets = [0, 8], sizes = [8, 8], strides = [1, 1]} : vector<8x32xf32> to vector<8x8xf32>
    %34 = vector.extract_strided_slice %16 {offsets = [0, 8], sizes = [8, 8], strides = [1, 1]} : vector<8x32xf32> to vector<8x8xf32>
    %35 = vector.extract_strided_slice %17 {offsets = [0, 8], sizes = [8, 8], strides = [1, 1]} : vector<8x32xf32> to vector<8x8xf32>
    %cst_19 = arith.constant dense<0.000000e+00> : vector<8x8xf32>
    %36 = tpu.matmul %33, %34, %cst_19 {dimension_numbers = #tpu.dot_dimension_numbers<[1], [1], [0], [0], [0, 0, 1, 0], [], []>} : vector<8x8xf32>, vector<8x8xf32>, vector<8x8xf32> -> vector<8x8xf32>
    %cst_20 = arith.constant dense<0xFF800000> : vector<8xf32>
    %37 = vector.multi_reduction <maximumf>, %36, %cst_20 [1] : vector<8x8xf32> to vector<8xf32>
    %38 = vector.shape_cast %37 : vector<8xf32> to vector<8x1xf32>
    %39 = vector.broadcast %38 : vector<8x1xf32> to vector<8x8xf32>
    %40 = arith.subf %36, %39 : vector<8x8xf32>
    %41 = math.exp %40 : vector<8x8xf32>
    %cst_21 = arith.constant dense<0.000000e+00> : vector<8xf32>
    %42 = vector.multi_reduction <add>, %41, %cst_21 [1] : vector<8x8xf32> to vector<8xf32>
    %43 = vector.shape_cast %42 : vector<8xf32> to vector<8x1xf32>
    %44 = tpu.reciprocal %43 {approx = true} : vector<8x1xf32> -> vector<8x1xf32>
    %45 = vector.broadcast %44 : vector<8x1xf32> to vector<8x8xf32>
    %46 = arith.mulf %41, %45 : vector<8x8xf32>
    %cst_22 = arith.constant dense<0.000000e+00> : vector<8x8xf32>
    %47 = tpu.matmul %46, %35, %cst_22 {dimension_numbers = #tpu.dot_dimension_numbers<[1], [0], [0], [1], [0, 0, 1, 1], [], []>} : vector<8x8xf32>, vector<8x8xf32>, vector<8x8xf32> -> vector<8x8xf32>
    %48 = vector.extract_strided_slice %10 {offsets = [0, 16], sizes = [8, 8], strides = [1, 1]} : vector<8x32xf32> to vector<8x8xf32>
    %49 = vector.extract_strided_slice %16 {offsets = [0, 16], sizes = [8, 8], strides = [1, 1]} : vector<8x32xf32> to vector<8x8xf32>
    %50 = vector.extract_strided_slice %17 {offsets = [0, 16], sizes = [8, 8], strides = [1, 1]} : vector<8x32xf32> to vector<8x8xf32>
    %cst_23 = arith.constant dense<0.000000e+00> : vector<8x8xf32>
    %51 = tpu.matmul %48, %49, %cst_23 {dimension_numbers = #tpu.dot_dimension_numbers<[1], [1], [0], [0], [0, 0, 1, 0], [], []>} : vector<8x8xf32>, vector<8x8xf32>, vector<8x8xf32> -> vector<8x8xf32>
    %cst_24 = arith.constant dense<0xFF800000> : vector<8xf32>
    %52 = vector.multi_reduction <maximumf>, %51, %cst_24 [1] : vector<8x8xf32> to vector<8xf32>
    %53 = vector.shape_cast %52 : vector<8xf32> to vector<8x1xf32>
    %54 = vector.broadcast %53 : vector<8x1xf32> to vector<8x8xf32>
    %55 = arith.subf %51, %54 : vector<8x8xf32>
    %56 = math.exp %55 : vector<8x8xf32>
    %cst_25 = arith.constant dense<0.000000e+00> : vector<8xf32>
    %57 = vector.multi_reduction <add>, %56, %cst_25 [1] : vector<8x8xf32> to vector<8xf32>
    %58 = vector.shape_cast %57 : vector<8xf32> to vector<8x1xf32>
    %59 = tpu.reciprocal %58 {approx = true} : vector<8x1xf32> -> vector<8x1xf32>
    %60 = vector.broadcast %59 : vector<8x1xf32> to vector<8x8xf32>
    %61 = arith.mulf %56, %60 : vector<8x8xf32>
    %cst_26 = arith.constant dense<0.000000e+00> : vector<8x8xf32>
    %62 = tpu.matmul %61, %50, %cst_26 {dimension_numbers = #tpu.dot_dimension_numbers<[1], [0], [0], [1], [0, 0, 1, 1], [], []>} : vector<8x8xf32>, vector<8x8xf32>, vector<8x8xf32> -> vector<8x8xf32>
    %63 = vector.extract_strided_slice %10 {offsets = [0, 24], sizes = [8, 8], strides = [1, 1]} : vector<8x32xf32> to vector<8x8xf32>
    %64 = vector.extract_strided_slice %16 {offsets = [0, 24], sizes = [8, 8], strides = [1, 1]} : vector<8x32xf32> to vector<8x8xf32>
    %65 = vector.extract_strided_slice %17 {offsets = [0, 24], sizes = [8, 8], strides = [1, 1]} : vector<8x32xf32> to vector<8x8xf32>
    %cst_27 = arith.constant dense<0.000000e+00> : vector<8x8xf32>
    %66 = tpu.matmul %63, %64, %cst_27 {dimension_numbers = #tpu.dot_dimension_numbers<[1], [1], [0], [0], [0, 0, 1, 0], [], []>} : vector<8x8xf32>, vector<8x8xf32>, vector<8x8xf32> -> vector<8x8xf32>
    %cst_28 = arith.constant dense<0xFF800000> : vector<8xf32>
    %67 = vector.multi_reduction <maximumf>, %66, %cst_28 [1] : vector<8x8xf32> to vector<8xf32>
    %68 = vector.shape_cast %67 : vector<8xf32> to vector<8x1xf32>
    %69 = vector.broadcast %68 : vector<8x1xf32> to vector<8x8xf32>
    %70 = arith.subf %66, %69 : vector<8x8xf32>
    %71 = math.exp %70 : vector<8x8xf32>
    %cst_29 = arith.constant dense<0.000000e+00> : vector<8xf32>
    %72 = vector.multi_reduction <add>, %71, %cst_29 [1] : vector<8x8xf32> to vector<8xf32>
    %73 = vector.shape_cast %72 : vector<8xf32> to vector<8x1xf32>
    %74 = tpu.reciprocal %73 {approx = true} : vector<8x1xf32> -> vector<8x1xf32>
    %75 = vector.broadcast %74 : vector<8x1xf32> to vector<8x8xf32>
    %76 = arith.mulf %71, %75 : vector<8x8xf32>
    %cst_30 = arith.constant dense<0.000000e+00> : vector<8x8xf32>
    %77 = tpu.matmul %76, %65, %cst_30 {dimension_numbers = #tpu.dot_dimension_numbers<[1], [0], [0], [1], [0, 0, 1, 1], [], []>} : vector<8x8xf32>, vector<8x8xf32>, vector<8x8xf32> -> vector<8x8xf32>
    %78 = tpu.concatenate %32, %47, %62, %77 in 1 : vector<8x8xf32>, vector<8x8xf32>, vector<8x8xf32>, vector<8x8xf32> -> vector<8x32xf32>
    %c0_31 = arith.constant 0 : index
    %c0_32 = arith.constant 0 : index
    %79 = vector.load %arg8[%c0_31, %c0_32] : memref<32x32xf32, #tpu.memory_space<vmem>>, vector<32x32xf32>
    %cst_33 = arith.constant dense<0.000000e+00> : vector<8x32xf32>
    %80 = tpu.matmul %78, %79, %cst_33 {dimension_numbers = #tpu.dot_dimension_numbers<[1], [0], [0], [1], [0, 0, 1, 1], [], []>} : vector<8x32xf32>, vector<32x32xf32>, vector<8x32xf32> -> vector<8x32xf32>
    %c0_34 = arith.constant 0 : index
    %c0_35 = arith.constant 0 : index
    %81 = vector.load %arg9[%c0_34, %c0_35] : memref<1x32xf32, #tpu.memory_space<vmem>>, vector<1x32xf32>
    %82 = vector.broadcast %81 : vector<1x32xf32> to vector<8x32xf32>
    %83 = arith.addf %80, %82 : vector<8x32xf32>
    %84 = arith.addf %1, %83 : vector<8x32xf32>
    %cst_36 = arith.constant dense<0.000000e+00> : vector<8xf32>
    %85 = vector.multi_reduction <add>, %84, %cst_36 [1] : vector<8x32xf32> to vector<8xf32>
    %86 = vector.shape_cast %85 : vector<8xf32> to vector<8x1xf32>
    %cst_37 = arith.constant 3.200000e+01 : f32
    %87 = vector.broadcast %cst_37 : f32 to vector<8x1xf32>
    %88 = arith.divf %86, %87 : vector<8x1xf32>
    %89 = vector.broadcast %88 : vector<8x1xf32> to vector<8x32xf32>
    %90 = arith.subf %84, %89 : vector<8x32xf32>
    %91 = arith.mulf %90, %90 : vector<8x32xf32>
    %cst_38 = arith.constant dense<0.000000e+00> : vector<8xf32>
    %92 = vector.multi_reduction <add>, %91, %cst_38 [1] : vector<8x32xf32> to vector<8xf32>
    %93 = vector.shape_cast %92 : vector<8xf32> to vector<8x1xf32>
    %cst_39 = arith.constant 3.200000e+01 : f32
    %94 = vector.broadcast %cst_39 : f32 to vector<8x1xf32>
    %95 = arith.divf %93, %94 : vector<8x1xf32>
    %96 = vector.broadcast %88 : vector<8x1xf32> to vector<8x32xf32>
    %97 = arith.subf %84, %96 : vector<8x32xf32>
    %cst_40 = arith.constant 9.99999974E-6 : f32
    %98 = vector.broadcast %cst_40 : f32 to vector<8x1xf32>
    %99 = arith.addf %95, %98 : vector<8x1xf32>
    %100 = math.rsqrt %99 : vector<8x1xf32>
    %101 = vector.broadcast %100 : vector<8x1xf32> to vector<8x32xf32>
    %102 = arith.mulf %97, %101 : vector<8x32xf32>
    %c0_41 = arith.constant 0 : index
    %c0_42 = arith.constant 0 : index
    %103 = vector.load %arg10[%c0_41, %c0_42] : memref<1x32xf32, #tpu.memory_space<vmem>>, vector<1x32xf32>
    %104 = vector.broadcast %103 : vector<1x32xf32> to vector<8x32xf32>
    %105 = arith.mulf %102, %104 : vector<8x32xf32>
    %c0_43 = arith.constant 0 : index
    %c0_44 = arith.constant 0 : index
    %106 = vector.load %arg11[%c0_43, %c0_44] : memref<1x32xf32, #tpu.memory_space<vmem>>, vector<1x32xf32>
    %107 = vector.broadcast %106 : vector<1x32xf32> to vector<8x32xf32>
    %108 = arith.addf %105, %107 : vector<8x32xf32>
    %c0_45 = arith.constant 0 : index
    %c0_46 = arith.constant 0 : index
    %109 = vector.load %arg12[%c0_45, %c0_46] : memref<32x64xf32, #tpu.memory_space<vmem>>, vector<32x64xf32>
    %cst_47 = arith.constant dense<0.000000e+00> : vector<8x64xf32>
    %110 = tpu.matmul %108, %109, %cst_47 {dimension_numbers = #tpu.dot_dimension_numbers<[1], [0], [0], [1], [0, 0, 1, 1], [], []>} : vector<8x32xf32>, vector<32x64xf32>, vector<8x64xf32> -> vector<8x64xf32>
    %c0_48 = arith.constant 0 : index
    %c0_49 = arith.constant 0 : index
    %111 = vector.load %arg13[%c0_48, %c0_49] : memref<1x64xf32, #tpu.memory_space<vmem>>, vector<1x64xf32>
    %112 = vector.broadcast %111 : vector<1x64xf32> to vector<8x64xf32>
    %113 = arith.addf %110, %112 : vector<8x64xf32>
    %cst_50 = arith.constant 0.000000e+00 : f32
    %114 = vector.broadcast %cst_50 : f32 to vector<8x64xf32>
    %115 = arith.maximumf %113, %114 : vector<8x64xf32>
    %c0_51 = arith.constant 0 : index
    %c0_52 = arith.constant 0 : index
    %116 = vector.load %arg14[%c0_51, %c0_52] : memref<64x32xf32, #tpu.memory_space<vmem>>, vector<64x32xf32>
    %cst_53 = arith.constant dense<0.000000e+00> : vector<8x32xf32>
    %117 = tpu.matmul %115, %116, %cst_53 {dimension_numbers = #tpu.dot_dimension_numbers<[1], [0], [0], [1], [0, 0, 1, 1], [], []>} : vector<8x64xf32>, vector<64x32xf32>, vector<8x32xf32> -> vector<8x32xf32>
    %c0_54 = arith.constant 0 : index
    %c0_55 = arith.constant 0 : index
    %118 = vector.load %arg15[%c0_54, %c0_55] : memref<1x32xf32, #tpu.memory_space<vmem>>, vector<1x32xf32>
    %119 = vector.broadcast %118 : vector<1x32xf32> to vector<8x32xf32>
    %120 = arith.addf %117, %119 : vector<8x32xf32>
    %121 = arith.addf %108, %120 : vector<8x32xf32>
    %cst_56 = arith.constant dense<0.000000e+00> : vector<8xf32>
    %122 = vector.multi_reduction <add>, %121, %cst_56 [1] : vector<8x32xf32> to vector<8xf32>
    %123 = vector.shape_cast %122 : vector<8xf32> to vector<8x1xf32>
    %cst_57 = arith.constant 3.200000e+01 : f32
    %124 = vector.broadcast %cst_57 : f32 to vector<8x1xf32>
    %125 = arith.divf %123, %124 : vector<8x1xf32>
    %126 = vector.broadcast %125 : vector<8x1xf32> to vector<8x32xf32>
    %127 = arith.subf %121, %126 : vector<8x32xf32>
    %128 = arith.mulf %127, %127 : vector<8x32xf32>
    %cst_58 = arith.constant dense<0.000000e+00> : vector<8xf32>
    %129 = vector.multi_reduction <add>, %128, %cst_58 [1] : vector<8x32xf32> to vector<8xf32>
    %130 = vector.shape_cast %129 : vector<8xf32> to vector<8x1xf32>
    %cst_59 = arith.constant 3.200000e+01 : f32
    %131 = vector.broadcast %cst_59 : f32 to vector<8x1xf32>
    %132 = arith.divf %130, %131 : vector<8x1xf32>
    %133 = vector.broadcast %125 : vector<8x1xf32> to vector<8x32xf32>
    %134 = arith.subf %121, %133 : vector<8x32xf32>
    %cst_60 = arith.constant 9.99999974E-6 : f32
    %135 = vector.broadcast %cst_60 : f32 to vector<8x1xf32>
    %136 = arith.addf %132, %135 : vector<8x1xf32>
    %137 = math.rsqrt %136 : vector<8x1xf32>
    %138 = vector.broadcast %137 : vector<8x1xf32> to vector<8x32xf32>
    %139 = arith.mulf %134, %138 : vector<8x32xf32>
    %c0_61 = arith.constant 0 : index
    %c0_62 = arith.constant 0 : index
    %140 = vector.load %arg16[%c0_61, %c0_62] : memref<1x32xf32, #tpu.memory_space<vmem>>, vector<1x32xf32>
    %141 = vector.broadcast %140 : vector<1x32xf32> to vector<8x32xf32>
    %142 = arith.mulf %139, %141 : vector<8x32xf32>
    %c0_63 = arith.constant 0 : index
    %c0_64 = arith.constant 0 : index
    %143 = vector.load %arg17[%c0_63, %c0_64] : memref<1x32xf32, #tpu.memory_space<vmem>>, vector<1x32xf32>
    %144 = vector.broadcast %143 : vector<1x32xf32> to vector<8x32xf32>
    %145 = arith.addf %142, %144 : vector<8x32xf32>
    %c0_65 = arith.constant 0 : index
    %c0_66 = arith.constant 0 : index
    %c0_67 = arith.constant 0 : index
    %146 = vector.load %arg18[%c0_65, %c0_66, %c0_67] : memref<1x8x32xf32, #tpu.memory_space<vmem>>, vector<1x8x32xf32>
    %147 = vector.shape_cast %146 : vector<1x8x32xf32> to vector<8x32xf32>
    %148 = vector.shape_cast %145 : vector<8x32xf32> to vector<1x8x32xf32>
    tpu.vector_store %arg18[%c0_65, %c0_66, %c0_67], %148 {strides = array<i32>} : memref<1x8x32xf32, #tpu.memory_space<vmem>>, vector<1x8x32xf32>,
    return
  }
  func.func @transform_0(%arg0: i32, %arg1: i32) -> (i32, i32, i32) {
    %c0_i32 = arith.constant 0 : i32
    %c0_i32_0 = arith.constant 0 : i32
    return %arg0, %arg1, %c0_i32 : i32, i32, i32
  }
  func.func @transform_1(%arg0: i32, %arg1: i32) -> (i32, i32, i32) {
    %c0_i32 = arith.constant 0 : i32
    %c0_i32_0 = arith.constant 0 : i32
    %c0_i32_1 = arith.constant 0 : i32
    return %arg0, %c0_i32, %c0_i32_0 : i32, i32, i32
  }
  func.func @transform_2(%arg0: i32, %arg1: i32) -> (i32, i32) {
    %c0_i32 = arith.constant 0 : i32
    %c0_i32_0 = arith.constant 0 : i32
    %c0_i32_1 = arith.constant 0 : i32
    return %c0_i32, %c0_i32_0 : i32, i32
  }
  func.func @transform_3(%arg0: i32, %arg1: i32) -> (i32, i32) {
    %c0_i32 = arith.constant 0 : i32
    %c0_i32_0 = arith.constant 0 : i32
    %c0_i32_1 = arith.constant 0 : i32
    return %c0_i32, %c0_i32_0 : i32, i32
  }
  func.func @transform_4(%arg0: i32, %arg1: i32) -> (i32, i32) {
    %c0_i32 = arith.constant 0 : i32
    %c0_i32_0 = arith.constant 0 : i32
    %c0_i32_1 = arith.constant 0 : i32
    return %c0_i32, %c0_i32_0 : i32, i32
  }
  func.func @transform_5(%arg0: i32, %arg1: i32) -> (i32, i32) {
    %c0_i32 = arith.constant 0 : i32
    %c0_i32_0 = arith.constant 0 : i32
    %c0_i32_1 = arith.constant 0 : i32
    return %c0_i32, %c0_i32_0 : i32, i32
  }
  func.func @transform_6(%arg0: i32, %arg1: i32) -> (i32, i32) {
    %c0_i32 = arith.constant 0 : i32
    %c0_i32_0 = arith.constant 0 : i32
    %c0_i32_1 = arith.constant 0 : i32
    return %c0_i32, %c0_i32_0 : i32, i32
  }
  func.func @transform_7(%arg0: i32, %arg1: i32) -> (i32, i32) {
    %c0_i32 = arith.constant 0 : i32
    %c0_i32_0 = arith.constant 0 : i32
    %c0_i32_1 = arith.constant 0 : i32
    return %c0_i32, %c0_i32_0 : i32, i32
  }
  func.func @transform_8(%arg0: i32, %arg1: i32) -> (i32, i32) {
    %c0_i32 = arith.constant 0 : i32
    %c0_i32_0 = arith.constant 0 : i32
    %c0_i32_1 = arith.constant 0 : i32
    return %c0_i32, %c0_i32_0 : i32, i32
  }
  func.func @transform_9(%arg0: i32, %arg1: i32) -> (i32, i32) {
    %c0_i32 = arith.constant 0 : i32
    %c0_i32_0 = arith.constant 0 : i32
    %c0_i32_1 = arith.constant 0 : i32
    return %c0_i32, %c0_i32_0 : i32, i32
  }
  func.func @transform_10(%arg0: i32, %arg1: i32) -> (i32, i32) {
    %c0_i32 = arith.constant 0 : i32
    %c0_i32_0 = arith.constant 0 : i32
    %c0_i32_1 = arith.constant 0 : i32
    return %c0_i32, %c0_i32_0 : i32, i32
  }
  func.func @transform_11(%arg0: i32, %arg1: i32) -> (i32, i32) {
    %c0_i32 = arith.constant 0 : i32
    %c0_i32_0 = arith.constant 0 : i32
    %c0_i32_1 = arith.constant 0 : i32
    return %c0_i32, %c0_i32_0 : i32, i32
  }
  func.func @transform_12(%arg0: i32, %arg1: i32) -> (i32, i32) {
    %c0_i32 = arith.constant 0 : i32
    %c0_i32_0 = arith.constant 0 : i32
    %c0_i32_1 = arith.constant 0 : i32
    return %c0_i32, %c0_i32_0 : i32, i32
  }
  func.func @transform_13(%arg0: i32, %arg1: i32) -> (i32, i32) {
    %c0_i32 = arith.constant 0 : i32
    %c0_i32_0 = arith.constant 0 : i32
    %c0_i32_1 = arith.constant 0 : i32
    return %c0_i32, %c0_i32_0 : i32, i32
  }
  func.func @transform_14(%arg0: i32, %arg1: i32) -> (i32, i32) {
    %c0_i32 = arith.constant 0 : i32
    %c0_i32_0 = arith.constant 0 : i32
    %c0_i32_1 = arith.constant 0 : i32
    return %c0_i32, %c0_i32_0 : i32, i32
  }
  func.func @transform_15(%arg0: i32, %arg1: i32) -> (i32, i32) {
    %c0_i32 = arith.constant 0 : i32
    %c0_i32_0 = arith.constant 0 : i32
    %c0_i32_1 = arith.constant 0 : i32
    return %c0_i32, %c0_i32_0 : i32, i32
  }
  func.func @transform_16(%arg0: i32, %arg1: i32) -> (i32, i32, i32) {
    %c0_i32 = arith.constant 0 : i32
    %c0_i32_0 = arith.constant 0 : i32
    return %arg0, %arg1, %c0_i32 : i32, i32, i32
  }
}

</mosaic_0001>

<llo_original>
// kernel: tpu_custom_call.1
$region0: #{tpu_custom_call.1}
  #allocation0 [shape = 'u32[]', space=smem, size = 0x4, offset = 0x4, fixed_abs, tag = 'smem constant byte address 0x4 - core index']
  #allocation1 [shape = 'u32[144,128]{1,0:T(1,128)}', space=vmem, size = 0x12000, scoped, tag = 'internal scratch']
  %s0 = inlined_call_operand.hbm [shape: f32[2,8,32], index: 0, kind: input, shape index: {}]
  %s1 = inlined_call_operand.hbm [shape: f32[2,8,32], index: 1, kind: input, shape index: {}]
  %s2 = inlined_call_operand.hbm [shape: f32[32,32], index: 2, kind: input, shape index: {}]
  %s3 = inlined_call_operand.hbm [shape: f32[1,32], index: 3, kind: input, shape index: {}]
  %s4 = inlined_call_operand.hbm [shape: f32[32,64], index: 4, kind: input, shape index: {}]
  %s5 = inlined_call_operand.hbm [shape: f32[1,64], index: 5, kind: input, shape index: {}]
  %s6 = inlined_call_operand.hbm [shape: f32[32,32], index: 6, kind: input, shape index: {}]
  %s7 = inlined_call_operand.hbm [shape: f32[1,32], index: 7, kind: input, shape index: {}]
  %s8 = inlined_call_operand.hbm [shape: f32[1,32], index: 8, kind: input, shape index: {}]
  %s9 = inlined_call_operand.hbm [shape: f32[1,32], index: 9, kind: input, shape index: {}]
  %s10 = inlined_call_operand.hbm [shape: f32[32,64], index: 10, kind: input, shape index: {}]
  %s11 = inlined_call_operand.hbm [shape: f32[1,64], index: 11, kind: input, shape index: {}]
  %s12 = inlined_call_operand.hbm [shape: f32[64,32], index: 12, kind: input, shape index: {}]
  %s13 = inlined_call_operand.hbm [shape: f32[1,32], index: 13, kind: input, shape index: {}]
  %s14 = inlined_call_operand.hbm [shape: f32[1,32], index: 14, kind: input, shape index: {}]
  %s15 = inlined_call_operand.hbm [shape: f32[1,32], index: 15, kind: input, shape index: {}]
  %s16 = inlined_call_operand.hbm [shape: f32[2,8,32], index: 16, kind: output, shape index: {}]
  %s17 = sld [smem:[#allocation0]]
  $region161: #{tpu_custom_call.1} parent=0
    _
  %s19 = ssub.s32 1, %s17
  %s20 = scalar_select 0, %s19, %s17
  $region1: #{tpu_custom_call.1} parent=0
    #allocation2 [shape = 'u8[8192]{0}', space=vmem, size = 0x2000, scoped, tag = 'input window, operand 0']
    #allocation3 [shape = 's32[2]{0}', space=sflag, size = 0x8, scoped, tag = 'scoped memory for tpu_custom_call.1']
    #allocation4 [shape = 's32[2]{0}', space=sflag, size = 0x8, scoped, tag = 'scoped memory for tpu_custom_call.1']
    #allocation5 [shape = 'u8[8192]{0}', space=vmem, size = 0x2000, scoped, tag = 'input window, operand 1']
    #allocation6 [shape = 's32[2]{0}', space=sflag, size = 0x8, scoped, tag = 'scoped memory for tpu_custom_call.1']
    #allocation7 [shape = 'u8[16384]{0}', space=vmem, size = 0x4000, scoped, tag = 'input window, operand 2, single buffered']
    #allocation8 [shape = 'u8[512]{0}', space=vmem, size = 0x400, scoped, tag = 'input window, operand 3, single buffered']
    #allocation9 [shape = 's32[1]{0}', space=sflag, size = 0x4, scoped, tag = 'scoped memory for tpu_custom_call.1']
    #allocation10 [shape = 'u8[16384]{0}', space=vmem, size = 0x4000, scoped, tag = 'input window, operand 4, single buffered']
    #allocation11 [shape = 'u8[512]{0}', space=vmem, size = 0x400, scoped, tag = 'input window, operand 5, single buffered']
    #allocation12 [shape = 's32[1]{0}', space=sflag, size = 0x4, scoped, tag = 'scoped memory for tpu_custom_call.1']
    #allocation13 [shape = 'u8[16384]{0}', space=vmem, size = 0x4000, scoped, tag = 'input window, operand 6, single buffered']
    #allocation14 [shape = 'u8[512]{0}', space=vmem, size = 0x400, scoped, tag = 'input window, operand 7, single buffered']
    #allocation15 [shape = 's32[1]{0}', space=sflag, size = 0x4, scoped, tag = 'scoped memory for tpu_custom_call.1']
    #allocation16 [shape = 'u8[512]{0}', space=vmem, size = 0x400, scoped, tag = 'input window, operand 8, single buffered']
    #allocation17 [shape = 'u8[512]{0}', space=vmem, size = 0x400, scoped, tag = 'input window, operand 9, single buffered']
    #allocation18 [shape = 's32[1]{0}', space=sflag, size = 0x4, scoped, tag = 'scoped memory for tpu_custom_call.1']
    #allocation19 [shape = 'u8[16384]{0}', space=vmem, size = 0x4000, scoped, tag = 'input window, operand 10, single buffered']
    #allocation20 [shape = 'u8[512]{0}', space=vmem, size = 0x400, scoped, tag = 'input window, operand 11, single buffered']
    #allocation21 [shape = 's32[1]{0}', space=sflag, size = 0x4, scoped, tag = 'scoped memory for tpu_custom_call.1']
    #allocation22 [shape = 'u8[32768]{0}', space=vmem, size = 0x8000, scoped, tag = 'input window, operand 12, single buffered']
    #allocation23 [shape = 'u8[512]{0}', space=vmem, size = 0x400, scoped, tag = 'input window, operand 13, single buffered']
    #allocation24 [shape = 's32[1]{0}', space=sflag, size = 0x4, scoped, tag = 'scoped memory for tpu_custom_call.1']
    #allocation25 [shape = 'u8[512]{0}', space=vmem, size = 0x400, scoped, tag = 'input window, operand 14, single buffered']
    #allocation26 [shape = 'u8[512]{0}', space=vmem, size = 0x400, scoped, tag = 'input window, operand 15, single buffered']
    #allocation27 [shape = 's32[1]{0}', space=sflag, size = 0x4, scoped, tag = 'scoped memory for tpu_custom_call.1']
    #allocation28 [shape = 'u8[8192]{0}', space=vmem, size = 0x2000, scoped, tag = 'output window, operand 0']
    %21 = vsyncpa [#allocation3], 0
    %s22 = scalar_lea.sflag [#allocation3], 1
    %23 = vsyncpa %s22, 0
    %24 = vsyncpa [#allocation6], 0
    %s25 = scalar_lea.sflag [#allocation6], 1
    %26 = vsyncpa %s25, 0
    %27 = vsyncpa [#allocation9], 0
    %28 = vsyncpa [#allocation12], 0
    %29 = vsyncpa [#allocation15], 0
    %30 = vsyncpa [#allocation18], 0
    %31 = vsyncpa [#allocation21], 0
    %32 = vsyncpa [#allocation24], 0
    %33 = vsyncpa [#allocation27], 0
    %34 = vsyncpa [#allocation4], 0
    %s35 = scalar_lea.sflag [#allocation4], 1
    %36 = vsyncpa %s35, 0
    loop: start=0, step=1, limit=4
    $region2: #{tpu_custom_call.1} parent=1 // loop_pre_header
      _
    $region3: #{tpu_custom_call.1} parent=1 // loop_header
      %s38 = sphi 0, %s42
      %p39 = scmp.ge.s32.totalorder %s38, 4
      %s45 = sphi 0, %s57
      %s46 = sphi 0, %s53
      %s47 = sphi 0, %s45
      %s48 = sphi 0, %s46
      %s49 = sphi 0, %s47
      %s50 = sphi 0, %s48
      %s62 = sphi 0, %s64
      %s65 = sphi 0, %s62
      %s66 = sphi 0, %s65
      %s82 = sphi 0, %s66
      %s88 = sphi 0, %s90
      %s91 = sphi 0, %s88
      %s92 = sphi 0, %s91
      %s108 = sphi 0, %s92
      %s112 = sphi 0, %s112
      %s114 = sphi 0, %s112
      %s115 = sphi 0, %s114
      %s129 = sphi 0, %s115
      %s133 = sphi 0, %s133
      %s135 = sphi 0, %s133
      %s136 = sphi 0, %s135
      %s150 = sphi 0, %s136
      %s154 = sphi 0, %s154
      %s156 = sphi 0, %s154
      %s157 = sphi 0, %s156
      %s171 = sphi 0, %s157
      %s175 = sphi 0, %s175
      %s177 = sphi 0, %s175
      %s178 = sphi 0, %s177
      %s192 = sphi 0, %s178
      %s196 = sphi 0, %s196
      %s198 = sphi 0, %s196
      %s199 = sphi 0, %s198
      %s213 = sphi 0, %s199
      %s217 = sphi 0, %s217
      %s219 = sphi 0, %s217
      %s220 = sphi 0, %s219
      %s234 = sphi 0, %s220
      %s238 = sphi 0, %s238
      %s240 = sphi 0, %s238
      %s241 = sphi 0, %s240
      %s255 = sphi 0, %s241
      %s259 = sphi 0, %s259
      %s261 = sphi 0, %s259
      %s262 = sphi 0, %s261
      %s276 = sphi 0, %s262
      %s280 = sphi 0, %s280
      %s282 = sphi 0, %s280
      %s283 = sphi 0, %s282
      %s297 = sphi 0, %s283
      %s301 = sphi 0, %s301
      %s303 = sphi 0, %s301
      %s304 = sphi 0, %s303
      %s318 = sphi 0, %s304
      %s322 = sphi 0, %s322
      %s324 = sphi 0, %s322
      %s325 = sphi 0, %s324
      %s339 = sphi 0, %s325
      %s343 = sphi 0, %s343
      %s345 = sphi 0, %s343
      %s346 = sphi 0, %s345
      %s360 = sphi 0, %s346
      %s364 = sphi 0, %s364
      %s366 = sphi 0, %s364
      %s367 = sphi 0, %s366
      %s381 = sphi 0, %s367
      %s385 = sphi 0, %s385
      %s387 = sphi 0, %s385
      %s388 = sphi 0, %s387
      %s402 = sphi 0, %s388
      %s410 = sphi 0, %s412
      %s413 = sphi 0, %s410
      %s414 = sphi 0, %s413
      %s430 = sphi 0, %s414
    $region4: #{tpu_custom_call.1} parent=1 // loop_header_branch
      %41 = sbr.rel (%p39) target = $region8
    $region5: #{tpu_custom_call.1} parent=1 // loop_body
      %s43 = ssub.s32 %s38, 1
      %s44 = ssub.s32 %s38, 2
      %s51 = sadd.s32 1, %s46
      %p52 = scmp.ge.s32.totalorder %s51, 1
      %s53 = scalar_select %p52, 0, %s51
      %s54 = sadd.s32 1, %s45
      %s55 = scalar_select %p52, %s54, %s45
      %p56 = scmp.ge.s32.totalorder %s55, 2
      %s57 = scalar_select %p56, 0, %s55
      %s58 = ssub.s32 %s45, %s57
      %s59 = ssub.s32 %s46, %s53
      %s60 = sor.u32 %s58, %s59
      %p61 = scmp.eq.s32.totalorder %s60, 0
      %s63 = sadd.s32 %s62, 1
      %s64 = scalar_select %p61, %s62, %s63
      %p67 = pneg %p61
      %p68 = scmp.eq.s32.totalorder %s38, 1
      %p69 = por %p67, %p68
      %p70 = scmp.ne.s32.totalorder %s62, %s65
      %p71 = scmp.eq.s32.totalorder %s38, 0
      %p72 = por %p70, %p71
      %p73 = scmp.ne.s32.totalorder %s62, %s65
      %p74 = scmp.eq.s32.totalorder %s43, 1
      %p75 = por %p73, %p74
      %p76 = scmp.ne.s32.totalorder %s65, %s66
      %p77 = scmp.eq.s32.totalorder %s43, 0
      %p78 = por %p76, %p77
      %p79 = scmp.ne.s32.totalorder %s65, %s66
      %p80 = scmp.eq.s32.totalorder %s44, 1
      %p81 = por %p79, %p80
      %p83 = scmp.ne.s32.totalorder %s66, %s82
      %p84 = scmp.eq.s32.totalorder %s44, 0
      %p85 = por %p83, %p84
      %s86 = ssub.s32 %s45, %s57
      %p87 = scmp.eq.s32.totalorder %s86, 0
      %s89 = sadd.s32 %s88, 1
      %s90 = scalar_select %p87, %s88, %s89
      %p93 = pneg %p87
      %p94 = scmp.eq.s32.totalorder %s38, 1
      %p95 = por %p93, %p94
      %p96 = scmp.ne.s32.totalorder %s88, %s91
      %p97 = scmp.eq.s32.totalorder %s38, 0
      %p98 = por %p96, %p97
      %p99 = scmp.ne.s32.totalorder %s88, %s91
      %p100 = scmp.eq.s32.totalorder %s43, 1
      %p101 = por %p99, %p100
      %p102 = scmp.ne.s32.totalorder %s91, %s92
      %p103 = scmp.eq.s32.totalorder %s43, 0
      %p104 = por %p102, %p103
      %p105 = scmp.ne.s32.totalorder %s91, %s92
      %p106 = scmp.eq.s32.totalorder %s44, 1
      %p107 = por %p105, %p106
      %p109 = scmp.ne.s32.totalorder %s92, %s108
      %p110 = scmp.eq.s32.totalorder %s44, 0
      %p111 = por %p109, %p110
      %s113 = sadd.s32 %s112, 1
      %p116 = scmp.eq.s32.totalorder %s38, 1
      %p117 = scmp.ne.s32.totalorder %s112, %s114
      %p118 = scmp.eq.s32.totalorder %s38, 0
      %p119 = por %p117, %p118
      %p120 = scmp.ne.s32.totalorder %s112, %s114
      %p121 = scmp.eq.s32.totalorder %s43, 1
      %p122 = por %p120, %p121
      %p123 = scmp.ne.s32.totalorder %s114, %s115
      %p124 = scmp.eq.s32.totalorder %s43, 0
      %p125 = por %p123, %p124
      %p126 = scmp.ne.s32.totalorder %s114, %s115
      %p127 = scmp.eq.s32.totalorder %s44, 1
      %p128 = por %p126, %p127
      %p130 = scmp.ne.s32.totalorder %s115, %s129
      %p131 = scmp.eq.s32.totalorder %s44, 0
      %p132 = por %p130, %p131
      %s134 = sadd.s32 %s133, 1
      %p137 = scmp.eq.s32.totalorder %s38, 1
      %p138 = scmp.ne.s32.totalorder %s133, %s135
      %p139 = scmp.eq.s32.totalorder %s38, 0
      %p140 = por %p138, %p139
      %p141 = scmp.ne.s32.totalorder %s133, %s135
      %p142 = scmp.eq.s32.totalorder %s43, 1
      %p143 = por %p141, %p142
      %p144 = scmp.ne.s32.totalorder %s135, %s136
      %p145 = scmp.eq.s32.totalorder %s43, 0
      %p146 = por %p144, %p145
      %p147 = scmp.ne.s32.totalorder %s135, %s136
      %p148 = scmp.eq.s32.totalorder %s44, 1
      %p149 = por %p147, %p148
      %p151 = scmp.ne.s32.totalorder %s136, %s150
      %p152 = scmp.eq.s32.totalorder %s44, 0
      %p153 = por %p151, %p152
      %s155 = sadd.s32 %s154, 1
      %p158 = scmp.eq.s32.totalorder %s38, 1
      %p159 = scmp.ne.s32.totalorder %s154, %s156
      %p160 = scmp.eq.s32.totalorder %s38, 0
      %p161 = por %p159, %p160
      %p162 = scmp.ne.s32.totalorder %s154, %s156
      %p163 = scmp.eq.s32.totalorder %s43, 1
      %p164 = por %p162, %p163
      %p165 = scmp.ne.s32.totalorder %s156, %s157
      %p166 = scmp.eq.s32.totalorder %s43, 0
      %p167 = por %p165, %p166
      %p168 = scmp.ne.s32.totalorder %s156, %s157
      %p169 = scmp.eq.s32.totalorder %s44, 1
      %p170 = por %p168, %p169
      %p172 = scmp.ne.s32.totalorder %s157, %s171
      %p173 = scmp.eq.s32.totalorder %s44, 0
      %p174 = por %p172, %p173
      %s176 = sadd.s32 %s175, 1
      %p179 = scmp.eq.s32.totalorder %s38, 1
      %p180 = scmp.ne.s32.totalorder %s175, %s177
      %p181 = scmp.eq.s32.totalorder %s38, 0
      %p182 = por %p180, %p181
      %p183 = scmp.ne.s32.totalorder %s175, %s177
      %p184 = scmp.eq.s32.totalorder %s43, 1
      %p185 = por %p183, %p184
      %p186 = scmp.ne.s32.totalorder %s177, %s178
      %p187 = scmp.eq.s32.totalorder %s43, 0
      %p188 = por %p186, %p187
      %p189 = scmp.ne.s32.totalorder %s177, %s178
      %p190 = scmp.eq.s32.totalorder %s44, 1
      %p191 = por %p189, %p190
      %p193 = scmp.ne.s32.totalorder %s178, %s192
      %p194 = scmp.eq.s32.totalorder %s44, 0
      %p195 = por %p193, %p194
      %s197 = sadd.s32 %s196, 1
      %p200 = scmp.eq.s32.totalorder %s38, 1
      %p201 = scmp.ne.s32.totalorder %s196, %s198
      %p202 = scmp.eq.s32.totalorder %s38, 0
      %p203 = por %p201, %p202
      %p204 = scmp.ne.s32.totalorder %s196, %s198
      %p205 = scmp.eq.s32.totalorder %s43, 1
      %p206 = por %p204, %p205
      %p207 = scmp.ne.s32.totalorder %s198, %s199
      %p208 = scmp.eq.s32.totalorder %s43, 0
      %p209 = por %p207, %p208
      %p210 = scmp.ne.s32.totalorder %s198, %s199
      %p211 = scmp.eq.s32.totalorder %s44, 1
      %p212 = por %p210, %p211
      %p214 = scmp.ne.s32.totalorder %s199, %s213
      %p215 = scmp.eq.s32.totalorder %s44, 0
      %p216 = por %p214, %p215
      %s218 = sadd.s32 %s217, 1
      %p221 = scmp.eq.s32.totalorder %s38, 1
      %p222 = scmp.ne.s32.totalorder %s217, %s219
      %p223 = scmp.eq.s32.totalorder %s38, 0
      %p224 = por %p222, %p223
      %p225 = scmp.ne.s32.totalorder %s217, %s219
      %p226 = scmp.eq.s32.totalorder %s43, 1
      %p227 = por %p225, %p226
      %p228 = scmp.ne.s32.totalorder %s219, %s220
      %p229 = scmp.eq.s32.totalorder %s43, 0
      %p230 = por %p228, %p229
      %p231 = scmp.ne.s32.totalorder %s219, %s220
      %p232 = scmp.eq.s32.totalorder %s44, 1
      %p233 = por %p231, %p232
      %p235 = scmp.ne.s32.totalorder %s220, %s234
      %p236 = scmp.eq.s32.totalorder %s44, 0
      %p237 = por %p235, %p236
      %s239 = sadd.s32 %s238, 1
      %p242 = scmp.eq.s32.totalorder %s38, 1
      %p243 = scmp.ne.s32.totalorder %s238, %s240
      %p244 = scmp.eq.s32.totalorder %s38, 0
      %p245 = por %p243, %p244
      %p246 = scmp.ne.s32.totalorder %s238, %s240
      %p247 = scmp.eq.s32.totalorder %s43, 1
      %p248 = por %p246, %p247
      %p249 = scmp.ne.s32.totalorder %s240, %s241
      %p250 = scmp.eq.s32.totalorder %s43, 0
      %p251 = por %p249, %p250
      %p252 = scmp.ne.s32.totalorder %s240, %s241
      %p253 = scmp.eq.s32.totalorder %s44, 1
      %p254 = por %p252, %p253
      %p256 = scmp.ne.s32.totalorder %s241, %s255
      %p257 = scmp.eq.s32.totalorder %s44, 0
      %p258 = por %p256, %p257
      %s260 = sadd.s32 %s259, 1
      %p263 = scmp.eq.s32.totalorder %s38, 1
      %p264 = scmp.ne.s32.totalorder %s259, %s261
      %p265 = scmp.eq.s32.totalorder %s38, 0
      %p266 = por %p264, %p265
      %p267 = scmp.ne.s32.totalorder %s259, %s261
      %p268 = scmp.eq.s32.totalorder %s43, 1
      %p269 = por %p267, %p268
      %p270 = scmp.ne.s32.totalorder %s261, %s262
      %p271 = scmp.eq.s32.totalorder %s43, 0
      %p272 = por %p270, %p271
      %p273 = scmp.ne.s32.totalorder %s261, %s262
      %p274 = scmp.eq.s32.totalorder %s44, 1
      %p275 = por %p273, %p274
      %p277 = scmp.ne.s32.totalorder %s262, %s276
      %p278 = scmp.eq.s32.totalorder %s44, 0
      %p279 = por %p277, %p278
      %s281 = sadd.s32 %s280, 1
      %p284 = scmp.eq.s32.totalorder %s38, 1
      %p285 = scmp.ne.s32.totalorder %s280, %s282
      %p286 = scmp.eq.s32.totalorder %s38, 0
      %p287 = por %p285, %p286
      %p288 = scmp.ne.s32.totalorder %s280, %s282
      %p289 = scmp.eq.s32.totalorder %s43, 1
      %p290 = por %p288, %p289
      %p291 = scmp.ne.s32.totalorder %s282, %s283
      %p292 = scmp.eq.s32.totalorder %s43, 0
      %p293 = por %p291, %p292
      %p294 = scmp.ne.s32.totalorder %s282, %s283
      %p295 = scmp.eq.s32.totalorder %s44, 1
      %p296 = por %p294, %p295
      %p298 = scmp.ne.s32.totalorder %s283, %s297
      %p299 = scmp.eq.s32.totalorder %s44, 0
      %p300 = por %p298, %p299
      %s302 = sadd.s32 %s301, 1
      %p305 = scmp.eq.s32.totalorder %s38, 1
      %p306 = scmp.ne.s32.totalorder %s301, %s303
      %p307 = scmp.eq.s32.totalorder %s38, 0
      %p308 = por %p306, %p307
      %p309 = scmp.ne.s32.totalorder %s301, %s303
      %p310 = scmp.eq.s32.totalorder %s43, 1
      %p311 = por %p309, %p310
      %p312 = scmp.ne.s32.totalorder %s303, %s304
      %p313 = scmp.eq.s32.totalorder %s43, 0
      %p314 = por %p312, %p313
      %p315 = scmp.ne.s32.totalorder %s303, %s304
      %p316 = scmp.eq.s32.totalorder %s44, 1
      %p317 = por %p315, %p316
      %p319 = scmp.ne.s32.totalorder %s304, %s318
      %p320 = scmp.eq.s32.totalorder %s44, 0
      %p321 = por %p319, %p320
      %s323 = sadd.s32 %s322, 1
      %p326 = scmp.eq.s32.totalorder %s38, 1
      %p327 = scmp.ne.s32.totalorder %s322, %s324
      %p328 = scmp.eq.s32.totalorder %s38, 0
      %p329 = por %p327, %p328
      %p330 = scmp.ne.s32.totalorder %s322, %s324
      %p331 = scmp.eq.s32.totalorder %s43, 1
      %p332 = por %p330, %p331
      %p333 = scmp.ne.s32.totalorder %s324, %s325
      %p334 = scmp.eq.s32.totalorder %s43, 0
      %p335 = por %p333, %p334
      %p336 = scmp.ne.s32.totalorder %s324, %s325
      %p337 = scmp.eq.s32.totalorder %s44, 1
      %p338 = por %p336, %p337
      %p340 = scmp.ne.s32.totalorder %s325, %s339
      %p341 = scmp.eq.s32.totalorder %s44, 0
      %p342 = por %p340, %p341
      %s344 = sadd.s32 %s343, 1
      %p347 = scmp.eq.s32.totalorder %s38, 1
      %p348 = scmp.ne.s32.totalorder %s343, %s345
      %p349 = scmp.eq.s32.totalorder %s38, 0
      %p350 = por %p348, %p349
      %p351 = scmp.ne.s32.totalorder %s343, %s345
      %p352 = scmp.eq.s32.totalorder %s43, 1
      %p353 = por %p351, %p352
      %p354 = scmp.ne.s32.totalorder %s345, %s346
      %p355 = scmp.eq.s32.totalorder %s43, 0
      %p356 = por %p354, %p355
      %p357 = scmp.ne.s32.totalorder %s345, %s346
      %p358 = scmp.eq.s32.totalorder %s44, 1
      %p359 = por %p357, %p358
      %p361 = scmp.ne.s32.totalorder %s346, %s360
      %p362 = scmp.eq.s32.totalorder %s44, 0
      %p363 = por %p361, %p362
      %s365 = sadd.s32 %s364, 1
      %p368 = scmp.eq.s32.totalorder %s38, 1
      %p369 = scmp.ne.s32.totalorder %s364, %s366
      %p370 = scmp.eq.s32.totalorder %s38, 0
      %p371 = por %p369, %p370
      %p372 = scmp.ne.s32.totalorder %s364, %s366
      %p373 = scmp.eq.s32.totalorder %s43, 1
      %p374 = por %p372, %p373
      %p375 = scmp.ne.s32.totalorder %s366, %s367
      %p376 = scmp.eq.s32.totalorder %s43, 0
      %p377 = por %p375, %p376
      %p378 = scmp.ne.s32.totalorder %s366, %s367
      %p379 = scmp.eq.s32.totalorder %s44, 1
      %p380 = por %p378, %p379
      %p382 = scmp.ne.s32.totalorder %s367, %s381
      %p383 = scmp.eq.s32.totalorder %s44, 0
      %p384 = por %p382, %p383
      %s386 = sadd.s32 %s385, 1
      %p389 = scmp.eq.s32.totalorder %s38, 1
      %p390 = scmp.ne.s32.totalorder %s385, %s387
      %p391 = scmp.eq.s32.totalorder %s38, 0
      %p392 = por %p390, %p391
      %p393 = scmp.ne.s32.totalorder %s385, %s387
      %p394 = scmp.eq.s32.totalorder %s43, 1
      %p395 = por %p393, %p394
      %p396 = scmp.ne.s32.totalorder %s387, %s388
      %p397 = scmp.eq.s32.totalorder %s43, 0
      %p398 = por %p396, %p397
      %p399 = scmp.ne.s32.totalorder %s387, %s388
      %p400 = scmp.eq.s32.totalorder %s44, 1
      %p401 = por %p399, %p400
      %p403 = scmp.ne.s32.totalorder %s388, %s402
      %p404 = scmp.eq.s32.totalorder %s44, 0
      %p405 = por %p403, %p404
      %s406 = ssub.s32 %s45, %s57
      %s407 = ssub.s32 %s46, %s53
      %s408 = sor.u32 %s406, %s407
      %p409 = scmp.eq.s32.totalorder %s408, 0
      %s411 = sadd.s32 %s410, 1
      %s412 = scalar_select %p409, %s410, %s411
      %p415 = pneg %p409
      %p416 = scmp.eq.s32.totalorder %s38, 1
      %p417 = por %p415, %p416
      %p418 = scmp.ne.s32.totalorder %s410, %s413
      %p419 = scmp.eq.s32.totalorder %s38, 0
      %p420 = por %p418, %p419
      %p421 = scmp.ne.s32.totalorder %s410, %s413
      %p422 = scmp.eq.s32.totalorder %s43, 1
      %p423 = por %p421, %p422
      %p424 = scmp.ne.s32.totalorder %s413, %s414
      %p425 = scmp.eq.s32.totalorder %s43, 0
      %p426 = por %p424, %p425
      %p427 = scmp.ne.s32.totalorder %s413, %s414
      %p428 = scmp.eq.s32.totalorder %s44, 1
      %p429 = por %p427, %p428
      %p431 = scmp.ne.s32.totalorder %s414, %s430
      %p432 = scmp.eq.s32.totalorder %s44, 0
      %p433 = por %p431, %p432
      %p434 = scmp.le.s32.totalorder 1, %s38
      %p435 = scmp.lt.s32.totalorder %s38, 3
      %p436 = pnand %p434, %p435
      %p437 = pneg %p436
      // Predicated region
      $region9: #{tpu_custom_call.1} parent=5 // pred_check
        _
      $region10: #{tpu_custom_call.1} parent=5 // pred_check_branch
        %439 = sbr.rel (%p436) target = $region12
      $region11: #{tpu_custom_call.1} parent=5 // pred_region
        %s440 = ssub.s32 %s38, 1
        // Predicated region
        $region13: #{tpu_custom_call.1} parent=11 // pred_check
          %p441 = pneg %p125
        $region14: #{tpu_custom_call.1} parent=11 // pred_check_branch
          %443 = sbr.rel (%p441) target = $region16
        $region15: #{tpu_custom_call.1} parent=11 // pred_region
          %s445 = ssub.s32 512, 512
          %446 = vsyncadd [#allocation6], %s445
          %s447 = sshll.u32 [#allocation7], 4
          %s448 = int_to_ptr.vmem [resolvable:$true] %s447
          %453 = dma.hbm_to_vmem [thread:$0]  %s2, 512, %s448, [#allocation6], 128, 128, 8
        $region16: #{tpu_custom_call.1} parent=11 // pred_fallthru
          _
        // Predicated region
        $region17: #{tpu_custom_call.1} parent=11 // pred_check
          %p454 = pneg %p146
        $region18: #{tpu_custom_call.1} parent=11 // pred_check_branch
          %456 = sbr.rel (%p454) target = $region20
        $region19: #{tpu_custom_call.1} parent=11 // pred_region
          %s458 = ssub.s32 16, 16
          %459 = vsyncadd [#allocation9], %s458
          %s461 = sshll.u32 [#allocation8], 4
          %s462 = int_to_ptr.vmem [resolvable:$true] %s461
          %464 = dma.hbm_to_vmem [thread:$0]  %s3, 16, %s462, [#allocation9]
        $region20: #{tpu_custom_call.1} parent=11 // pred_fallthru
          _
        // Predicated region
        $region21: #{tpu_custom_call.1} parent=11 // pred_check
          %p465 = pneg %p167
        $region22: #{tpu_custom_call.1} parent=11 // pred_check_branch
          %467 = sbr.rel (%p465) target = $region24
        $region23: #{tpu_custom_call.1} parent=11 // pred_region
          %s469 = ssub.s32 512, 512
          %470 = vsyncadd [#allocation9], %s469
          %s471 = sshll.u32 [#allocation10], 4
          %s472 = int_to_ptr.vmem [resolvable:$true] %s471
          %477 = dma.hbm_to_vmem [thread:$0]  %s4, 512, %s472, [#allocation9], 128, 128, 8
        $region24: #{tpu_custom_call.1} parent=11 // pred_fallthru
          _
        // Predicated region
        $region25: #{tpu_custom_call.1} parent=11 // pred_check
          %p478 = pneg %p188
        $region26: #{tpu_custom_call.1} parent=11 // pred_check_branch
          %480 = sbr.rel (%p478) target = $region28
        $region27: #{tpu_custom_call.1} parent=11 // pred_region
          %s482 = ssub.s32 16, 16
          %483 = vsyncadd [#allocation12], %s482
          %s485 = sshll.u32 [#allocation11], 4
          %s486 = int_to_ptr.vmem [resolvable:$true] %s485
          %488 = dma.hbm_to_vmem [thread:$0]  %s5, 16, %s486, [#allocation12]
        $region28: #{tpu_custom_call.1} parent=11 // pred_fallthru
          _
        // Predicated region
        $region29: #{tpu_custom_call.1} parent=11 // pred_check
          %p489 = pneg %p209
        $region30: #{tpu_custom_call.1} parent=11 // pred_check_branch
          %491 = sbr.rel (%p489) target = $region32
        $region31: #{tpu_custom_call.1} parent=11 // pred_region
          %s493 = ssub.s32 512, 512
          %494 = vsyncadd [#allocation12], %s493
          %s495 = sshll.u32 [#allocation13], 4
          %s496 = int_to_ptr.vmem [resolvable:$true] %s495
          %501 = dma.hbm_to_vmem [thread:$0]  %s6, 512, %s496, [#allocation12], 128, 128, 8
        $region32: #{tpu_custom_call.1} parent=11 // pred_fallthru
          _
        // Predicated region
        $region33: #{tpu_custom_call.1} parent=11 // pred_check
          %p502 = pneg %p230
        $region34: #{tpu_custom_call.1} parent=11 // pred_check_branch
          %504 = sbr.rel (%p502) target = $region36
        $region35: #{tpu_custom_call.1} parent=11 // pred_region
          %s506 = ssub.s32 16, 16
          %507 = vsyncadd [#allocation15], %s506
          %s509 = sshll.u32 [#allocation14], 4
          %s510 = int_to_ptr.vmem [resolvable:$true] %s509
          %512 = dma.hbm_to_vmem [thread:$0]  %s7, 16, %s510, [#allocation15]
        $region36: #{tpu_custom_call.1} parent=11 // pred_fallthru
          _
        // Predicated region
        $region37: #{tpu_custom_call.1} parent=11 // pred_check
          %p513 = pneg %p251
        $region38: #{tpu_custom_call.1} parent=11 // pred_check_branch
          %515 = sbr.rel (%p513) target = $region40
        $region39: #{tpu_custom_call.1} parent=11 // pred_region
          %s517 = ssub.s32 16, 16
          %518 = vsyncadd [#allocation15], %s517
          %s520 = sshll.u32 [#allocation16], 4
          %s521 = int_to_ptr.vmem [resolvable:$true] %s520
          %523 = dma.hbm_to_vmem [thread:$0]  %s8, 16, %s521, [#allocation15]
        $region40: #{tpu_custom_call.1} parent=11 // pred_fallthru
          _
        // Predicated region
        $region41: #{tpu_custom_call.1} parent=11 // pred_check
          %p524 = pneg %p272
        $region42: #{tpu_custom_call.1} parent=11 // pred_check_branch
          %526 = sbr.rel (%p524) target = $region44
        $region43: #{tpu_custom_call.1} parent=11 // pred_region
          %s528 = ssub.s32 16, 16
          %529 = vsyncadd [#allocation18], %s528
          %s531 = sshll.u32 [#allocation17], 4
          %s532 = int_to_ptr.vmem [resolvable:$true] %s531
          %534 = dma.hbm_to_vmem [thread:$0]  %s9, 16, %s532, [#allocation18]
        $region44: #{tpu_custom_call.1} parent=11 // pred_fallthru
          _
        // Predicated region
        $region45: #{tpu_custom_call.1} parent=11 // pred_check
          %p535 = pneg %p293
        $region46: #{tpu_custom_call.1} parent=11 // pred_check_branch
          %537 = sbr.rel (%p535) target = $region48
        $region47: #{tpu_custom_call.1} parent=11 // pred_region
          %s539 = ssub.s32 512, 512
          %540 = vsyncadd [#allocation18], %s539
          %s541 = sshll.u32 [#allocation19], 4
          %s542 = int_to_ptr.vmem [resolvable:$true] %s541
          %547 = dma.hbm_to_vmem [thread:$0]  %s10, 512, %s542, [#allocation18], 128, 128, 8
        $region48: #{tpu_custom_call.1} parent=11 // pred_fallthru
          _
        // Predicated region
        $region49: #{tpu_custom_call.1} parent=11 // pred_check
          %p548 = pneg %p314
        $region50: #{tpu_custom_call.1} parent=11 // pred_check_branch
          %550 = sbr.rel (%p548) target = $region52
        $region51: #{tpu_custom_call.1} parent=11 // pred_region
          %s552 = ssub.s32 16, 16
          %553 = vsyncadd [#allocation21], %s552
          %s555 = sshll.u32 [#allocation20], 4
          %s556 = int_to_ptr.vmem [resolvable:$true] %s555
          %558 = dma.hbm_to_vmem [thread:$0]  %s11, 16, %s556, [#allocation21]
        $region52: #{tpu_custom_call.1} parent=11 // pred_fallthru
          _
        // Predicated region
        $region53: #{tpu_custom_call.1} parent=11 // pred_check
          %p559 = pneg %p335
        $region54: #{tpu_custom_call.1} parent=11 // pred_check_branch
          %561 = sbr.rel (%p559) target = $region56
        $region55: #{tpu_custom_call.1} parent=11 // pred_region
          %s563 = ssub.s32 1024, 1024
          %564 = vsyncadd [#allocation21], %s563
          %s565 = sshll.u32 [#allocation22], 4
          %s566 = int_to_ptr.vmem [resolvable:$true] %s565
          %571 = dma.hbm_to_vmem [thread:$0]  %s12, 1024, %s566, [#allocation21], 128, 128, 8
        $region56: #{tpu_custom_call.1} parent=11 // pred_fallthru
          _
        // Predicated region
        $region57: #{tpu_custom_call.1} parent=11 // pred_check
          %p572 = pneg %p356
        $region58: #{tpu_custom_call.1} parent=11 // pred_check_branch
          %574 = sbr.rel (%p572) target = $region60
        $region59: #{tpu_custom_call.1} parent=11 // pred_region
          %s576 = ssub.s32 16, 16
          %577 = vsyncadd [#allocation24], %s576
          %s579 = sshll.u32 [#allocation23], 4
          %s580 = int_to_ptr.vmem [resolvable:$true] %s579
          %582 = dma.hbm_to_vmem [thread:$0]  %s13, 16, %s580, [#allocation24]
        $region60: #{tpu_custom_call.1} parent=11 // pred_fallthru
          _
        // Predicated region
        $region61: #{tpu_custom_call.1} parent=11 // pred_check
          %p583 = pneg %p377
        $region62: #{tpu_custom_call.1} parent=11 // pred_check_branch
          %585 = sbr.rel (%p583) target = $region64
        $region63: #{tpu_custom_call.1} parent=11 // pred_region
          %s587 = ssub.s32 16, 16
          %588 = vsyncadd [#allocation24], %s587
          %s590 = sshll.u32 [#allocation25], 4
          %s591 = int_to_ptr.vmem [resolvable:$true] %s590
          %593 = dma.hbm_to_vmem [thread:$0]  %s14, 16, %s591, [#allocation24]
        $region64: #{tpu_custom_call.1} parent=11 // pred_fallthru
          _
        // Predicated region
        $region65: #{tpu_custom_call.1} parent=11 // pred_check
          %p594 = pneg %p398
        $region66: #{tpu_custom_call.1} parent=11 // pred_check_branch
          %596 = sbr.rel (%p594) target = $region68
        $region67: #{tpu_custom_call.1} parent=11 // pred_region
          %s598 = ssub.s32 16, 16
          %599 = vsyncadd [#allocation27], %s598
          %s601 = sshll.u32 [#allocation26], 4
          %s602 = int_to_ptr.vmem [resolvable:$true] %s601
          %604 = dma.hbm_to_vmem [thread:$0]  %s15, 16, %s602, [#allocation27]
        $region68: #{tpu_custom_call.1} parent=11 // pred_fallthru
          _
      $region12: #{tpu_custom_call.1} parent=5 // pred_fallthru
        _
      %p605 = scmp.lt.s32.totalorder %s38, 2
      // Predicated region
      $region69: #{tpu_custom_call.1} parent=5 // pred_check
        %p606 = pneg %p605
      $region70: #{tpu_custom_call.1} parent=5 // pred_check_branch
        %608 = sbr.rel (%p606) target = $region72
      $region71: #{tpu_custom_call.1} parent=5 // pred_region
        // Predicated region
        $region73: #{tpu_custom_call.1} parent=71 // pred_check
          %p609 = pneg %p72
        $region74: #{tpu_custom_call.1} parent=71 // pred_check_branch
          %611 = sbr.rel (%p609) target = $region76
        $region75: #{tpu_custom_call.1} parent=71 // pred_region
          %s612 = sand.u32 %s62, 1
          %s613 = scalar_lea.sflag [#allocation3], %s612
          %s614 = sand.u32 %s62, 1
          %s615 = smul.addr %s614, 8
          %s616 = scalar_lea.vmem [#allocation2], %s615
          %s618 = ssub.s32 128, 128
          %619 = vsyncadd %s613, %s618
          %s620 = sadd.s32 %s46, %s45
          %s621 = smul.addr %s620, 128
          %s622 = scalar_lea.hbm %s0, %s621
          %s624 = sshll.u32 %s616, 4
          %s625 = int_to_ptr.vmem [resolvable:$true] %s624
          %627 = dma.hbm_to_vmem [thread:$0]  %s622, 128, %s625, %s613
        $region76: #{tpu_custom_call.1} parent=71 // pred_fallthru
          _
        // Predicated region
        $region77: #{tpu_custom_call.1} parent=71 // pred_check
          %p628 = pneg %p98
        $region78: #{tpu_custom_call.1} parent=71 // pred_check_branch
          %630 = sbr.rel (%p628) target = $region80
        $region79: #{tpu_custom_call.1} parent=71 // pred_region
          %s631 = sand.u32 %s38, 1
          %s632 = scalar_lea.sflag [#allocation6], %s631
          %s633 = sand.u32 %s88, 1
          %s634 = smul.addr %s633, 8
          %s635 = scalar_lea.vmem [#allocation5], %s634
          %s637 = ssub.s32 128, 128
          %638 = vsyncadd %s632, %s637
          %s639 = smul.addr %s45, 128
          %s640 = scalar_lea.hbm %s1, %s639
          %s642 = sshll.u32 %s635, 4
          %s643 = int_to_ptr.vmem [resolvable:$true] %s642
          %645 = dma.hbm_to_vmem [thread:$0]  %s640, 128, %s643, %s632
        $region80: #{tpu_custom_call.1} parent=71 // pred_fallthru
          _
      $region72: #{tpu_custom_call.1} parent=5 // pred_fallthru
        _
      %p646 = scmp.le.s32.totalorder 1, %s38
      %p647 = scmp.lt.s32.totalorder %s38, 3
      %p648 = pnand %p646, %p647
      %p649 = pneg %p648
      // Predicated region
      $region81: #{tpu_custom_call.1} parent=5 // pred_check
        _
      $region82: #{tpu_custom_call.1} parent=5 // pred_check_branch
        %651 = sbr.rel (%p648) target = $region84
      $region83: #{tpu_custom_call.1} parent=5 // pred_region
        %s652 = ssub.s32 %s38, 1
        %s653 = sand.u32 %s65, 1
        %s654 = scalar_lea.sflag [#allocation3], %s653
        %s655 = sand.u32 %s65, 1
        %s656 = smul.addr %s655, 8
        %s657 = scalar_lea.vmem [#allocation2], %s656
        // Predicated region
        $region85: #{tpu_custom_call.1} parent=83 // pred_check
          %p658 = pneg %p78
        $region86: #{tpu_custom_call.1} parent=83 // pred_check_branch
          %660 = sbr.rel (%p658) target = $region88
        $region87: #{tpu_custom_call.1} parent=83 // pred_region
          %661 = dma.done %s654, 128
        $region88: #{tpu_custom_call.1} parent=83 // pred_fallthru
          _
        %s662 = sand.u32 %s43, 1
        %s663 = scalar_lea.sflag [#allocation6], %s662
        %s664 = sand.u32 %s91, 1
        %s665 = smul.addr %s664, 8
        %s666 = scalar_lea.vmem [#allocation5], %s665
        // Predicated region
        $region89: #{tpu_custom_call.1} parent=83 // pred_check
          %p667 = pneg %p104
        $region90: #{tpu_custom_call.1} parent=83 // pred_check_branch
          %669 = sbr.rel (%p667) target = $region92
        $region91: #{tpu_custom_call.1} parent=83 // pred_region
          %670 = dma.done %s663, 128
        $region92: #{tpu_custom_call.1} parent=83 // pred_fallthru
          _
        // Predicated region
        $region93: #{tpu_custom_call.1} parent=83 // pred_check
          %p671 = pneg %p125
        $region94: #{tpu_custom_call.1} parent=83 // pred_check_branch
          %673 = sbr.rel (%p671) target = $region96
        $region95: #{tpu_custom_call.1} parent=83 // pred_region
          %674 = dma.done [#allocation6], 512
        $region96: #{tpu_custom_call.1} parent=83 // pred_fallthru
          _
        // Predicated region
        $region97: #{tpu_custom_call.1} parent=83 // pred_check
          %p675 = pneg %p146
        $region98: #{tpu_custom_call.1} parent=83 // pred_check_branch
          %677 = sbr.rel (%p675) target = $region100
        $region99: #{tpu_custom_call.1} parent=83 // pred_region
          %678 = dma.done [#allocation9], 16
        $region100: #{tpu_custom_call.1} parent=83 // pred_fallthru
          _
        // Predicated region
        $region101: #{tpu_custom_call.1} parent=83 // pred_check
          %p679 = pneg %p167
        $region102: #{tpu_custom_call.1} parent=83 // pred_check_branch
          %681 = sbr.rel (%p679) target = $region104
        $region103: #{tpu_custom_call.1} parent=83 // pred_region
          %682 = dma.done [#allocation9], 512
        $region104: #{tpu_custom_call.1} parent=83 // pred_fallthru
          _
        // Predicated region
        $region105: #{tpu_custom_call.1} parent=83 // pred_check
          %p683 = pneg %p188
        $region106: #{tpu_custom_call.1} parent=83 // pred_check_branch
          %685 = sbr.rel (%p683) target = $region108
        $region107: #{tpu_custom_call.1} parent=83 // pred_region
          %686 = dma.done [#allocation12], 16
        $region108: #{tpu_custom_call.1} parent=83 // pred_fallthru
          _
        // Predicated region
        $region109: #{tpu_custom_call.1} parent=83 // pred_check
          %p687 = pneg %p209
        $region110: #{tpu_custom_call.1} parent=83 // pred_check_branch
          %689 = sbr.rel (%p687) target = $region112
        $region111: #{tpu_custom_call.1} parent=83 // pred_region
          %690 = dma.done [#allocation12], 512
        $region112: #{tpu_custom_call.1} parent=83 // pred_fallthru
          _
        // Predicated region
        $region113: #{tpu_custom_call.1} parent=83 // pred_check
          %p691 = pneg %p230
        $region114: #{tpu_custom_call.1} parent=83 // pred_check_branch
          %693 = sbr.rel (%p691) target = $region116
        $region115: #{tpu_custom_call.1} parent=83 // pred_region
          %694 = dma.done [#allocation15], 16
        $region116: #{tpu_custom_call.1} parent=83 // pred_fallthru
          _
        // Predicated region
        $region117: #{tpu_custom_call.1} parent=83 // pred_check
          %p695 = pneg %p251
        $region118: #{tpu_custom_call.1} parent=83 // pred_check_branch
          %697 = sbr.rel (%p695) target = $region120
        $region119: #{tpu_custom_call.1} parent=83 // pred_region
          %698 = dma.done [#allocation15], 16
        $region120: #{tpu_custom_call.1} parent=83 // pred_fallthru
          _
        // Predicated region
        $region121: #{tpu_custom_call.1} parent=83 // pred_check
          %p699 = pneg %p272
        $region122: #{tpu_custom_call.1} parent=83 // pred_check_branch
          %701 = sbr.rel (%p699) target = $region124
        $region123: #{tpu_custom_call.1} parent=83 // pred_region
          %702 = dma.done [#allocation18], 16
        $region124: #{tpu_custom_call.1} parent=83 // pred_fallthru
          _
        // Predicated region
        $region125: #{tpu_custom_call.1} parent=83 // pred_check
          %p703 = pneg %p293
        $region126: #{tpu_custom_call.1} parent=83 // pred_check_branch
          %705 = sbr.rel (%p703) target = $region128
        $region127: #{tpu_custom_call.1} parent=83 // pred_region
          %706 = dma.done [#allocation18], 512
        $region128: #{tpu_custom_call.1} parent=83 // pred_fallthru
          _
        // Predicated region
        $region129: #{tpu_custom_call.1} parent=83 // pred_check
          %p707 = pneg %p314
        $region130: #{tpu_custom_call.1} parent=83 // pred_check_branch
          %709 = sbr.rel (%p707) target = $region132
        $region131: #{tpu_custom_call.1} parent=83 // pred_region
          %710 = dma.done [#allocation21], 16
        $region132: #{tpu_custom_call.1} parent=83 // pred_fallthru
          _
        // Predicated region
        $region133: #{tpu_custom_call.1} parent=83 // pred_check
          %p711 = pneg %p335
        $region134: #{tpu_custom_call.1} parent=83 // pred_check_branch
          %713 = sbr.rel (%p711) target = $region136
        $region135: #{tpu_custom_call.1} parent=83 // pred_region
          %714 = dma.done [#allocation21], 1024
        $region136: #{tpu_custom_call.1} parent=83 // pred_fallthru
          _
        // Predicated region
        $region137: #{tpu_custom_call.1} parent=83 // pred_check
          %p715 = pneg %p356
        $region138: #{tpu_custom_call.1} parent=83 // pred_check_branch
          %717 = sbr.rel (%p715) target = $region140
        $region139: #{tpu_custom_call.1} parent=83 // pred_region
          %718 = dma.done [#allocation24], 16
        $region140: #{tpu_custom_call.1} parent=83 // pred_fallthru
          _
        // Predicated region
        $region141: #{tpu_custom_call.1} parent=83 // pred_check
          %p719 = pneg %p377
        $region142: #{tpu_custom_call.1} parent=83 // pred_check_branch
          %721 = sbr.rel (%p719) target = $region144
        $region143: #{tpu_custom_call.1} parent=83 // pred_region
          %722 = dma.done [#allocation24], 16
        $region144: #{tpu_custom_call.1} parent=83 // pred_fallthru
          _
        // Predicated region
        $region145: #{tpu_custom_call.1} parent=83 // pred_check
          %p723 = pneg %p398
        $region146: #{tpu_custom_call.1} parent=83 // pred_check_branch
          %725 = sbr.rel (%p723) target = $region148
        $region147: #{tpu_custom_call.1} parent=83 // pred_region
          %726 = dma.done [#allocation27], 16
        $region148: #{tpu_custom_call.1} parent=83 // pred_fallthru
          _
        %s727 = sand.u32 %s65, 1
        %s728 = scalar_lea.sflag [#allocation3], %s727
        %s729 = sand.u32 %s65, 1
        %s730 = smul.addr %s729, 8
        %s731 = scalar_lea.vmem [#allocation2], %s730
        %p732 = pneg %p78
        %p733 = pneg %p75
        %s734 = sand.u32 %s43, 1
        %s735 = scalar_lea.sflag [#allocation6], %s734
        %s736 = sand.u32 %s91, 1
        %s737 = smul.addr %s736, 8
        %s738 = scalar_lea.vmem [#allocation5], %s737
        %p739 = pneg %p104
        %p740 = pneg %p101
        %p741 = pneg %p125
        %p742 = pneg %p122
        %p743 = pneg %p146
        %p744 = pneg %p143
        %p745 = pneg %p167
        %p746 = pneg %p164
        %p747 = pneg %p188
        %p748 = pneg %p185
        %p749 = pneg %p209
        %p750 = pneg %p206
        %p751 = pneg %p230
        %p752 = pneg %p227
        %p753 = pneg %p251
        %p754 = pneg %p248
        %p755 = pneg %p272
        %p756 = pneg %p269
        %p757 = pneg %p293
        %p758 = pneg %p290
        %p759 = pneg %p314
        %p760 = pneg %p311
        %p761 = pneg %p335
        %p762 = pneg %p332
        %p763 = pneg %p356
        %p764 = pneg %p353
        %p765 = pneg %p377
        %p766 = pneg %p374
        %p767 = pneg %p398
        %p768 = pneg %p395
        %p769 = pneg %p426
        %p770 = pneg %p423
        %s771 = sand.u32 %s413, 1
        %s772 = scalar_lea.sflag [#allocation4], %s771
        %s773 = sand.u32 %s413, 1
        %s774 = smul.addr %s773, 8
        %s775 = scalar_lea.vmem [#allocation28], %s774
        %v776 = vld [vmem:[%s657] sm:$0xff]
        %v777 = vld [vmem:[%s666] sm:$0xff]
        %v778 = vld [vmem:[#allocation7] sm:$0xff]
        %v779 = vld [vmem:[#allocation7 + $0x8] sm:$0xff]
        %v780 = vld [vmem:[#allocation7 + $0x10] sm:$0xff]
        %v781 = vld [vmem:[#allocation7 + $0x18] sm:$0xff]
        %v782 = vld [vmem:[#allocation8] sm:$0x1]
        %v784 = vlaneseq
        %v785 = vshrl.u32 %v784, 7
        %v786 = vsub.s32 0, %v785
        %v787 = vrot.slane %v782, %v786
        %vm789 = vcmask 261120
        %v791 = vsel %vm789, %v776, 0
        %793 = vmatprep.subr.mxu0 0.0
        %794 = vmatpush1.msra.mxu0 %v778
        %795 = vmatprep.subr.mxu0 0.0
        %796 = vmatpush1.msra.mxu0 %v779
        %797 = vmatprep.subr.mxu0 0.0
        %798 = vmatpush1.msra.mxu0 %v780
        %799 = vmatprep.subr.mxu0 0.0
        %800 = vmatpush1.msra.mxu0 %v781
        %801 = vmatprep.subr.mxu0 0.0
        %802 = vmatpush1.msra.mxu0 0.0
        %803 = vmatprep.subr.mxu0 0.0
        %804 = vmatpush1.msra.mxu0 0.0
        %805 = vmatprep.subr.mxu0 0.0
        %806 = vmatpush1.msra.mxu0 0.0
        %807 = vmatprep.subr.mxu0 0.0
        %808 = vmatpush1.msra.mxu0 0.0
        %809 = vmatprep.subr.mxu0 0.0
        %810 = vmatpush1.msra.mxu0 0.0
        %811 = vmatprep.subr.mxu0 0.0
        %812 = vmatpush1.msra.mxu0 0.0
        %813 = vmatprep.subr.mxu0 0.0
        %814 = vmatpush1.msra.mxu0 0.0
        %815 = vmatprep.subr.mxu0 0.0
        %816 = vmatpush1.msra.mxu0 0.0
        %817 = vmatprep.subr.mxu0 0.0
        %818 = vmatpush1.msra.mxu0 0.0
        %819 = vmatprep.subr.mxu0 0.0
        %820 = vmatpush1.msra.mxu0 0.0
        %821 = vmatprep.subr.mxu0 0.0
        %822 = vmatpush1.msra.mxu0 0.0
        %823 = vmatprep.subr.mxu0 0.0
        %824 = vmatpush1.msra.mxu0 0.0
        %825 = vmatprep.subr.mxu0 0.0
        %826 = vmatpush1.msra.mxu0 0.0
        %827 = vmatprep.subr.mxu0 0.0
        %828 = vmatpush1.msra.mxu0 0.0
        %829 = vmatprep.subr.mxu0 0.0
        %830 = vmatpush1.msra.mxu0 0.0
        %831 = vmatprep.subr.mxu0 0.0
        %832 = vmatpush1.msra.mxu0 0.0
        %833 = vmatprep.subr.mxu0 0.0
        %834 = vmatpush1.msra.mxu0 0.0
        %835 = vmatprep.subr.mxu0 0.0
        %836 = vmatpush1.msra.mxu0 0.0
        %837 = vmatprep.subr.mxu0 0.0
        %838 = vmatpush1.msra.mxu0 0.0
        %839 = vmatprep.subr.mxu0 0.0
        %840 = vmatpush1.msra.mxu0 0.0
        %841 = vmatprep.subr.mxu0 0.0
        %842 = vmatpush1.msra.mxu0 0.0
        %843 = vmatprep.subr.mxu0 0.0
        %844 = vmatpush1.msra.mxu0 0.0
        %845 = vmatprep.subr.mxu0 0.0
        %846 = vmatpush1.msra.mxu0 0.0
        %847 = vmatprep.subr.mxu0 0.0
        %848 = vmatpush1.msra.mxu0 0.0
        %849 = vmatprep.subr.mxu0 0.0
        %850 = vmatpush1.msra.mxu0 0.0
        %851 = vmatprep.subr.mxu0 0.0
        %852 = vmatpush1.msra.mxu0 0.0
        %853 = vmatprep.subr.mxu0 0.0
        %854 = vmatpush1.msra.mxu0 0.0
        %855 = vmatprep.subr.mxu0 0.0
        %856 = vmatpush1.msra.mxu0 0.0
        %857 = vmatprep.mubr.f32.mxu0 0.0
        %858 = vmatmul.mubr.f32.gmra.mrb[0].mxu0 %v791
        %v859 = vpop.f32.mrb[0].mxu0
        %v860 = vadd.f32 %v787, %v859
        %v861 = vpop.f32.mrb[0].mxu0
        %862 = vdwg.mxu0
        %v863 = vmul.f32 %v860, 0.35355338
        %v864 = vld [vmem:[#allocation10] sm:$0xff]
        %v865 = vld [vmem:[#allocation10 + $0x8] sm:$0xff]
        %v866 = vld [vmem:[#allocation10 + $0x10] sm:$0xff]
        %v867 = vld [vmem:[#allocation10 + $0x18] sm:$0xff]
        %v868 = vld [vmem:[#allocation11] sm:$0x1]
        %v870 = vlaneseq
        %v871 = vshrl.u32 %v870, 7
        %v872 = vsub.s32 0, %v871
        %v873 = vrot.slane %v868, %v872
        %v876 = vsel %vm789, %v777, 0
        %878 = vmatprep.subr.mxu0 0.0
        %879 = vmatpush1.msra.mxu0 %v864
        %880 = vmatprep.subr.mxu0 0.0
        %881 = vmatpush1.msra.mxu0 %v865
        %882 = vmatprep.subr.mxu0 0.0
        %883 = vmatpush1.msra.mxu0 %v866
        %884 = vmatprep.subr.mxu0 0.0
        %885 = vmatpush1.msra.mxu0 %v867
        %886 = vmatprep.subr.mxu0 0.0
        %887 = vmatpush1.msra.mxu0 0.0
        %888 = vmatprep.subr.mxu0 0.0
        %889 = vmatpush1.msra.mxu0 0.0
        %890 = vmatprep.subr.mxu0 0.0
        %891 = vmatpush1.msra.mxu0 0.0
        %892 = vmatprep.subr.mxu0 0.0
        %893 = vmatpush1.msra.mxu0 0.0
        %894 = vmatprep.subr.mxu0 0.0
        %895 = vmatpush1.msra.mxu0 0.0
        %896 = vmatprep.subr.mxu0 0.0
        %897 = vmatpush1.msra.mxu0 0.0
        %898 = vmatprep.subr.mxu0 0.0
        %899 = vmatpush1.msra.mxu0 0.0
        %900 = vmatprep.subr.mxu0 0.0
        %901 = vmatpush1.msra.mxu0 0.0
        %902 = vmatprep.subr.mxu0 0.0
        %903 = vmatpush1.msra.mxu0 0.0
        %904 = vmatprep.subr.mxu0 0.0
        %905 = vmatpush1.msra.mxu0 0.0
        %906 = vmatprep.subr.mxu0 0.0
        %907 = vmatpush1.msra.mxu0 0.0
        %908 = vmatprep.subr.mxu0 0.0
        %909 = vmatpush1.msra.mxu0 0.0
        %910 = vmatprep.subr.mxu0 0.0
        %911 = vmatpush1.msra.mxu0 0.0
        %912 = vmatprep.subr.mxu0 0.0
        %913 = vmatpush1.msra.mxu0 0.0
        %914 = vmatprep.subr.mxu0 0.0
        %915 = vmatpush1.msra.mxu0 0.0
        %916 = vmatprep.subr.mxu0 0.0
        %917 = vmatpush1.msra.mxu0 0.0
        %918 = vmatprep.subr.mxu0 0.0
        %919 = vmatpush1.msra.mxu0 0.0
        %920 = vmatprep.subr.mxu0 0.0
        %921 = vmatpush1.msra.mxu0 0.0
        %922 = vmatprep.subr.mxu0 0.0
        %923 = vmatpush1.msra.mxu0 0.0
        %924 = vmatprep.subr.mxu0 0.0
        %925 = vmatpush1.msra.mxu0 0.0
        %926 = vmatprep.subr.mxu0 0.0
        %927 = vmatpush1.msra.mxu0 0.0
        %928 = vmatprep.subr.mxu0 0.0
        %929 = vmatpush1.msra.mxu0 0.0
        %930 = vmatprep.subr.mxu0 0.0
        %931 = vmatpush1.msra.mxu0 0.0
        %932 = vmatprep.subr.mxu0 0.0
        %933 = vmatpush1.msra.mxu0 0.0
        %934 = vmatprep.subr.mxu0 0.0
        %935 = vmatpush1.msra.mxu0 0.0
        %936 = vmatprep.subr.mxu0 0.0
        %937 = vmatpush1.msra.mxu0 0.0
        %938 = vmatprep.subr.mxu0 0.0
        %939 = vmatpush1.msra.mxu0 0.0
        %940 = vmatprep.subr.mxu0 0.0
        %941 = vmatpush1.msra.mxu0 0.0
        %942 = vmatprep.mubr.f32.mxu0 0.0
        %943 = vmatmul.mubr.f32.gmra.mrb[0].mxu0 %v876
        %v944 = vpop.f32.mrb[0].mxu0
        %v945 = vadd.f32 %v873, %v944
        %v946 = vpop.f32.mrb[0].mxu0
        %947 = vdwg.mxu0
        %vm948 = vcmask 64512
        %v950 = vsel %vm948, %v863, 0
        %v953 = vsel %vm948, %v945, 0
        %955 = vmatprep.subr.mxu0 0.0
        %956 = vmatpush1.xpose.msra.mxu0 %v953
        %957 = vmatprep.subr.mxu0 0.0
        %958 = vmatpush1.xpose.msra.mxu0 0.0
        %959 = vmatprep.subr.mxu0 0.0
        %960 = vmatpush1.xpose.msra.mxu0 0.0
        %961 = vmatprep.subr.mxu0 0.0
        %962 = vmatpush1.xpose.msra.mxu0 0.0
        %963 = vmatprep.subr.mxu0 0.0
        %964 = vmatpush1.xpose.msra.mxu0 0.0
        %965 = vmatprep.subr.mxu0 0.0
        %966 = vmatpush1.xpose.msra.mxu0 0.0
        %967 = vmatprep.subr.mxu0 0.0
        %968 = vmatpush1.xpose.msra.mxu0 0.0
        %969 = vmatprep.subr.mxu0 0.0
        %970 = vmatpush1.xpose.msra.mxu0 0.0
        %971 = vmatprep.subr.mxu0 0.0
        %972 = vmatpush1.xpose.msra.mxu0 0.0
        %973 = vmatprep.subr.mxu0 0.0
        %974 = vmatpush1.xpose.msra.mxu0 0.0
        %975 = vmatprep.subr.mxu0 0.0
        %976 = vmatpush1.xpose.msra.mxu0 0.0
        %977 = vmatprep.subr.mxu0 0.0
        %978 = vmatpush1.xpose.msra.mxu0 0.0
        %979 = vmatprep.subr.mxu0 0.0
        %980 = vmatpush1.xpose.msra.mxu0 0.0
        %981 = vmatprep.subr.mxu0 0.0
        %982 = vmatpush1.xpose.msra.mxu0 0.0
        %983 = vmatprep.subr.mxu0 0.0
        %984 = vmatpush1.xpose.msra.mxu0 0.0
        %985 = vmatprep.subr.mxu0 0.0
        %986 = vmatpush1.xpose.msra.mxu0 0.0
        %987 = vmatprep.subr.mxu0 0.0
        %988 = vmatpush1.xpose.msra.mxu0 0.0
        %989 = vmatprep.subr.mxu0 0.0
        %990 = vmatpush1.xpose.msra.mxu0 0.0
        %991 = vmatprep.subr.mxu0 0.0
        %992 = vmatpush1.xpose.msra.mxu0 0.0
        %993 = vmatprep.subr.mxu0 0.0
        %994 = vmatpush1.xpose.msra.mxu0 0.0
        %995 = vmatprep.subr.mxu0 0.0
        %996 = vmatpush1.xpose.msra.mxu0 0.0
        %997 = vmatprep.subr.mxu0 0.0
        %998 = vmatpush1.xpose.msra.mxu0 0.0
        %999 = vmatprep.subr.mxu0 0.0
        %1000 = vmatpush1.xpose.msra.mxu0 0.0
        %1001 = vmatprep.subr.mxu0 0.0
        %1002 = vmatpush1.xpose.msra.mxu0 0.0
        %1003 = vmatprep.subr.mxu0 0.0
        %1004 = vmatpush1.xpose.msra.mxu0 0.0
        %1005 = vmatprep.subr.mxu0 0.0
        %1006 = vmatpush1.xpose.msra.mxu0 0.0
        %1007 = vmatprep.subr.mxu0 0.0
        %1008 = vmatpush1.xpose.msra.mxu0 0.0
        %1009 = vmatprep.subr.mxu0 0.0
        %1010 = vmatpush1.xpose.msra.mxu0 0.0
        %1011 = vmatprep.subr.mxu0 0.0
        %1012 = vmatpush1.xpose.msra.mxu0 0.0
        %1013 = vmatprep.subr.mxu0 0.0
        %1014 = vmatpush1.xpose.msra.mxu0 0.0
        %1015 = vmatprep.subr.mxu0 0.0
        %1016 = vmatpush1.xpose.msra.mxu0 0.0
        %1017 = vmatprep.subr.mxu0 0.0
        %1018 = vmatpush1.xpose.msra.mxu0 0.0
        %1019 = vmatprep.mubr.f32.mxu0 0.0
        %1020 = vmatmul.mubr.f32.gmra.mrb[0].mxu0 %v950
        %v1021 = vpop.f32.mrb[0].mxu0
        %v1022 = vadd.f32 0.0, %v1021
        %v1023 = vpop.f32.mrb[0].mxu0
        %1024 = vdwg.mxu0
        %v1025 = vsel %vm948, %v1022, -inf
        %1026 = vmax.xlane.f32.xlu0 %v1025
        %v1027 = vpop.xlane.xlu0 %1026
        %v1028 = vsub.f32 %v1022, %v1027
        %v1029 = vmul.f32 %v1028, 1.442695
        %v1030 = vpow.pop %v1029
        %v1031 = vsel %vm948, %v1030, 0.0
        %1032 = vadd.xlane.f32.xlu0 %v1031
        %v1033 = vpop.xlane.xlu0 %1032
        %v1034 = vrcp.pop %v1033
        %v1035 = vmul.f32 %v1030, %v1034
        %1036 = vrot.lane.b32.xlu0 %v945, 96
        %v1037 = vpop.permute.xlu0 %1036
        %v1040 = vsel %vm948, %v1035, 0
        %1042 = vmatprep.subr.mxu0 0.0
        %1043 = vmatpush1.msra.mxu0 %v1037
        %1044 = vmatprep.subr.mxu0 0.0
        %1045 = vmatpush1.msra.mxu0 0.0
        %1046 = vmatprep.subr.mxu0 0.0
        %1047 = vmatpush1.msra.mxu0 0.0
        %1048 = vmatprep.subr.mxu0 0.0
        %1049 = vmatpush1.msra.mxu0 0.0
        %1050 = vmatprep.subr.mxu0 0.0
        %1051 = vmatpush1.msra.mxu0 0.0
        %1052 = vmatprep.subr.mxu0 0.0
        %1053 = vmatpush1.msra.mxu0 0.0
        %1054 = vmatprep.subr.mxu0 0.0
        %1055 = vmatpush1.msra.mxu0 0.0
        %1056 = vmatprep.subr.mxu0 0.0
        %1057 = vmatpush1.msra.mxu0 0.0
        %1058 = vmatprep.subr.mxu0 0.0
        %1059 = vmatpush1.msra.mxu0 0.0
        %1060 = vmatprep.subr.mxu0 0.0
        %1061 = vmatpush1.msra.mxu0 0.0
        %1062 = vmatprep.subr.mxu0 0.0
        %1063 = vmatpush1.msra.mxu0 0.0
        %1064 = vmatprep.subr.mxu0 0.0
        %1065 = vmatpush1.msra.mxu0 0.0
        %1066 = vmatprep.subr.mxu0 0.0
        %1067 = vmatpush1.msra.mxu0 0.0
        %1068 = vmatprep.subr.mxu0 0.0
        %1069 = vmatpush1.msra.mxu0 0.0
        %1070 = vmatprep.subr.mxu0 0.0
        %1071 = vmatpush1.msra.mxu0 0.0
        %1072 = vmatprep.subr.mxu0 0.0
        %1073 = vmatpush1.msra.mxu0 0.0
        %1074 = vmatprep.subr.mxu0 0.0
        %1075 = vmatpush1.msra.mxu0 0.0
        %1076 = vmatprep.subr.mxu0 0.0
        %1077 = vmatpush1.msra.mxu0 0.0
        %1078 = vmatprep.subr.mxu0 0.0
        %1079 = vmatpush1.msra.mxu0 0.0
        %1080 = vmatprep.subr.mxu0 0.0
        %1081 = vmatpush1.msra.mxu0 0.0
        %1082 = vmatprep.subr.mxu0 0.0
        %1083 = vmatpush1.msra.mxu0 0.0
        %1084 = vmatprep.subr.mxu0 0.0
        %1085 = vmatpush1.msra.mxu0 0.0
        %1086 = vmatprep.subr.mxu0 0.0
        %1087 = vmatpush1.msra.mxu0 0.0
        %1088 = vmatprep.subr.mxu0 0.0
        %1089 = vmatpush1.msra.mxu0 0.0
        %1090 = vmatprep.subr.mxu0 0.0
        %1091 = vmatpush1.msra.mxu0 0.0
        %1092 = vmatprep.subr.mxu0 0.0
        %1093 = vmatpush1.msra.mxu0 0.0
        %1094 = vmatprep.subr.mxu0 0.0
        %1095 = vmatpush1.msra.mxu0 0.0
        %1096 = vmatprep.subr.mxu0 0.0
        %1097 = vmatpush1.msra.mxu0 0.0
        %1098 = vmatprep.subr.mxu0 0.0
        %1099 = vmatpush1.msra.mxu0 0.0
        %1100 = vmatprep.subr.mxu0 0.0
        %1101 = vmatpush1.msra.mxu0 0.0
        %1102 = vmatprep.subr.mxu0 0.0
        %1103 = vmatpush1.msra.mxu0 0.0
        %1104 = vmatprep.subr.mxu0 0.0
        %1105 = vmatpush1.msra.mxu0 0.0
        %1106 = vmatprep.mubr.f32.mxu0 0.0
        %1107 = vmatmul.mubr.f32.gmra.mrb[0].mxu0 %v1040
        %v1108 = vpop.f32.mrb[0].mxu0
        %v1109 = vadd.f32 0.0, %v1108
        %v1110 = vpop.f32.mrb[0].mxu0
        %1111 = vdwg.mxu0
        %1112 = vrot.lane.b32.xlu0 %v863, 120
        %v1113 = vpop.permute.xlu0 %1112
        %1114 = vrot.lane.b32.xlu0 %v945, 120
        %v1115 = vpop.permute.xlu0 %1114
        %v1116 = vsel %vm948, %v1113, 0
        %v1118 = vsel %vm948, %v1115, 0
        %1120 = vmatprep.subr.mxu0 0.0
        %1121 = vmatpush1.xpose.msra.mxu0 %v1118
        %1122 = vmatprep.subr.mxu0 0.0
        %1123 = vmatpush1.xpose.msra.mxu0 0.0
        %1124 = vmatprep.subr.mxu0 0.0
        %1125 = vmatpush1.xpose.msra.mxu0 0.0
        %1126 = vmatprep.subr.mxu0 0.0
        %1127 = vmatpush1.xpose.msra.mxu0 0.0
        %1128 = vmatprep.subr.mxu0 0.0
        %1129 = vmatpush1.xpose.msra.mxu0 0.0
        %1130 = vmatprep.subr.mxu0 0.0
        %1131 = vmatpush1.xpose.msra.mxu0 0.0
        %1132 = vmatprep.subr.mxu0 0.0
        %1133 = vmatpush1.xpose.msra.mxu0 0.0
        %1134 = vmatprep.subr.mxu0 0.0
        %1135 = vmatpush1.xpose.msra.mxu0 0.0
        %1136 = vmatprep.subr.mxu0 0.0
        %1137 = vmatpush1.xpose.msra.mxu0 0.0
        %1138 = vmatprep.subr.mxu0 0.0
        %1139 = vmatpush1.xpose.msra.mxu0 0.0
        %1140 = vmatprep.subr.mxu0 0.0
        %1141 = vmatpush1.xpose.msra.mxu0 0.0
        %1142 = vmatprep.subr.mxu0 0.0
        %1143 = vmatpush1.xpose.msra.mxu0 0.0
        %1144 = vmatprep.subr.mxu0 0.0
        %1145 = vmatpush1.xpose.msra.mxu0 0.0
        %1146 = vmatprep.subr.mxu0 0.0
        %1147 = vmatpush1.xpose.msra.mxu0 0.0
        %1148 = vmatprep.subr.mxu0 0.0
        %1149 = vmatpush1.xpose.msra.mxu0 0.0
        %1150 = vmatprep.subr.mxu0 0.0
        %1151 = vmatpush1.xpose.msra.mxu0 0.0
        %1152 = vmatprep.subr.mxu0 0.0
        %1153 = vmatpush1.xpose.msra.mxu0 0.0
        %1154 = vmatprep.subr.mxu0 0.0
        %1155 = vmatpush1.xpose.msra.mxu0 0.0
        %1156 = vmatprep.subr.mxu0 0.0
        %1157 = vmatpush1.xpose.msra.mxu0 0.0
        %1158 = vmatprep.subr.mxu0 0.0
        %1159 = vmatpush1.xpose.msra.mxu0 0.0
        %1160 = vmatprep.subr.mxu0 0.0
        %1161 = vmatpush1.xpose.msra.mxu0 0.0
        %1162 = vmatprep.subr.mxu0 0.0
        %1163 = vmatpush1.xpose.msra.mxu0 0.0
        %1164 = vmatprep.subr.mxu0 0.0
        %1165 = vmatpush1.xpose.msra.mxu0 0.0
        %1166 = vmatprep.subr.mxu0 0.0
        %1167 = vmatpush1.xpose.msra.mxu0 0.0
        %1168 = vmatprep.subr.mxu0 0.0
        %1169 = vmatpush1.xpose.msra.mxu0 0.0
        %1170 = vmatprep.subr.mxu0 0.0
        %1171 = vmatpush1.xpose.msra.mxu0 0.0
        %1172 = vmatprep.subr.mxu0 0.0
        %1173 = vmatpush1.xpose.msra.mxu0 0.0
        %1174 = vmatprep.subr.mxu0 0.0
        %1175 = vmatpush1.xpose.msra.mxu0 0.0
        %1176 = vmatprep.subr.mxu0 0.0
        %1177 = vmatpush1.xpose.msra.mxu0 0.0
        %1178 = vmatprep.subr.mxu0 0.0
        %1179 = vmatpush1.xpose.msra.mxu0 0.0
        %1180 = vmatprep.subr.mxu0 0.0
        %1181 = vmatpush1.xpose.msra.mxu0 0.0
        %1182 = vmatprep.subr.mxu0 0.0
        %1183 = vmatpush1.xpose.msra.mxu0 0.0
        %1184 = vmatprep.mubr.f32.mxu0 0.0
        %1185 = vmatmul.mubr.f32.gmra.mrb[0].mxu0 %v1116
        %v1186 = vpop.f32.mrb[0].mxu0
        %v1187 = vadd.f32 0.0, %v1186
        %v1188 = vpop.f32.mrb[0].mxu0
        %1189 = vdwg.mxu0
        %v1190 = vsel %vm948, %v1187, -inf
        %1191 = vmax.xlane.f32.xlu0 %v1190
        %v1192 = vpop.xlane.xlu0 %1191
        %v1193 = vsub.f32 %v1187, %v1192
        %v1194 = vmul.f32 %v1193, 1.442695
        %v1195 = vpow.pop %v1194
        %v1196 = vsel %vm948, %v1195, 0.0
        %1197 = vadd.xlane.f32.xlu0 %v1196
        %v1198 = vpop.xlane.xlu0 %1197
        %v1199 = vrcp.pop %v1198
        %v1200 = vmul.f32 %v1195, %v1199
        %1201 = vrot.lane.b32.xlu0 %v945, 88
        %v1202 = vpop.permute.xlu0 %1201
        %v1205 = vsel %vm948, %v1200, 0
        %1207 = vmatprep.subr.mxu0 0.0
        %1208 = vmatpush1.msra.mxu0 %v1202
        %1209 = vmatprep.subr.mxu0 0.0
        %1210 = vmatpush1.msra.mxu0 0.0
        %1211 = vmatprep.subr.mxu0 0.0
        %1212 = vmatpush1.msra.mxu0 0.0
        %1213 = vmatprep.subr.mxu0 0.0
        %1214 = vmatpush1.msra.mxu0 0.0
        %1215 = vmatprep.subr.mxu0 0.0
        %1216 = vmatpush1.msra.mxu0 0.0
        %1217 = vmatprep.subr.mxu0 0.0
        %1218 = vmatpush1.msra.mxu0 0.0
        %1219 = vmatprep.subr.mxu0 0.0
        %1220 = vmatpush1.msra.mxu0 0.0
        %1221 = vmatprep.subr.mxu0 0.0
        %1222 = vmatpush1.msra.mxu0 0.0
        %1223 = vmatprep.subr.mxu0 0.0
        %1224 = vmatpush1.msra.mxu0 0.0
        %1225 = vmatprep.subr.mxu0 0.0
        %1226 = vmatpush1.msra.mxu0 0.0
        %1227 = vmatprep.subr.mxu0 0.0
        %1228 = vmatpush1.msra.mxu0 0.0
        %1229 = vmatprep.subr.mxu0 0.0
        %1230 = vmatpush1.msra.mxu0 0.0
        %1231 = vmatprep.subr.mxu0 0.0
        %1232 = vmatpush1.msra.mxu0 0.0
        %1233 = vmatprep.subr.mxu0 0.0
        %1234 = vmatpush1.msra.mxu0 0.0
        %1235 = vmatprep.subr.mxu0 0.0
        %1236 = vmatpush1.msra.mxu0 0.0
        %1237 = vmatprep.subr.mxu0 0.0
        %1238 = vmatpush1.msra.mxu0 0.0
        %1239 = vmatprep.subr.mxu0 0.0
        %1240 = vmatpush1.msra.mxu0 0.0
        %1241 = vmatprep.subr.mxu0 0.0
        %1242 = vmatpush1.msra.mxu0 0.0
        %1243 = vmatprep.subr.mxu0 0.0
        %1244 = vmatpush1.msra.mxu0 0.0
        %1245 = vmatprep.subr.mxu0 0.0
        %1246 = vmatpush1.msra.mxu0 0.0
        %1247 = vmatprep.subr.mxu0 0.0
        %1248 = vmatpush1.msra.mxu0 0.0
        %1249 = vmatprep.subr.mxu0 0.0
        %1250 = vmatpush1.msra.mxu0 0.0
        %1251 = vmatprep.subr.mxu0 0.0
        %1252 = vmatpush1.msra.mxu0 0.0
        %1253 = vmatprep.subr.mxu0 0.0
        %1254 = vmatpush1.msra.mxu0 0.0
        %1255 = vmatprep.subr.mxu0 0.0
        %1256 = vmatpush1.msra.mxu0 0.0
        %1257 = vmatprep.subr.mxu0 0.0
        %1258 = vmatpush1.msra.mxu0 0.0
        %1259 = vmatprep.subr.mxu0 0.0
        %1260 = vmatpush1.msra.mxu0 0.0
        %1261 = vmatprep.subr.mxu0 0.0
        %1262 = vmatpush1.msra.mxu0 0.0
        %1263 = vmatprep.subr.mxu0 0.0
        %1264 = vmatpush1.msra.mxu0 0.0
        %1265 = vmatprep.subr.mxu0 0.0
        %1266 = vmatpush1.msra.mxu0 0.0
        %1267 = vmatprep.subr.mxu0 0.0
        %1268 = vmatpush1.msra.mxu0 0.0
        %1269 = vmatprep.subr.mxu0 0.0
        %1270 = vmatpush1.msra.mxu0 0.0
        %1271 = vmatprep.mubr.f32.mxu0 0.0
        %1272 = vmatmul.mubr.f32.gmra.mrb[0].mxu0 %v1205
        %v1273 = vpop.f32.mrb[0].mxu0
        %v1274 = vadd.f32 0.0, %v1273
        %v1275 = vpop.f32.mrb[0].mxu0
        %1276 = vdwg.mxu0
        %1277 = vrot.lane.b32.xlu0 %v863, 112
        %v1278 = vpop.permute.xlu0 %1277
        %1279 = vrot.lane.b32.xlu0 %v945, 112
        %v1280 = vpop.permute.xlu0 %1279
        %v1281 = vsel %vm948, %v1278, 0
        %v1283 = vsel %vm948, %v1280, 0
        %1285 = vmatprep.subr.mxu0 0.0
        %1286 = vmatpush1.xpose.msra.mxu0 %v1283
        %1287 = vmatprep.subr.mxu0 0.0
        %1288 = vmatpush1.xpose.msra.mxu0 0.0
        %1289 = vmatprep.subr.mxu0 0.0
        %1290 = vmatpush1.xpose.msra.mxu0 0.0
        %1291 = vmatprep.subr.mxu0 0.0
        %1292 = vmatpush1.xpose.msra.mxu0 0.0
        %1293 = vmatprep.subr.mxu0 0.0
        %1294 = vmatpush1.xpose.msra.mxu0 0.0
        %1295 = vmatprep.subr.mxu0 0.0
        %1296 = vmatpush1.xpose.msra.mxu0 0.0
        %1297 = vmatprep.subr.mxu0 0.0
        %1298 = vmatpush1.xpose.msra.mxu0 0.0
        %1299 = vmatprep.subr.mxu0 0.0
        %1300 = vmatpush1.xpose.msra.mxu0 0.0
        %1301 = vmatprep.subr.mxu0 0.0
        %1302 = vmatpush1.xpose.msra.mxu0 0.0
        %1303 = vmatprep.subr.mxu0 0.0
        %1304 = vmatpush1.xpose.msra.mxu0 0.0
        %1305 = vmatprep.subr.mxu0 0.0
        %1306 = vmatpush1.xpose.msra.mxu0 0.0
        %1307 = vmatprep.subr.mxu0 0.0
        %1308 = vmatpush1.xpose.msra.mxu0 0.0
        %1309 = vmatprep.subr.mxu0 0.0
        %1310 = vmatpush1.xpose.msra.mxu0 0.0
        %1311 = vmatprep.subr.mxu0 0.0
        %1312 = vmatpush1.xpose.msra.mxu0 0.0
        %1313 = vmatprep.subr.mxu0 0.0
        %1314 = vmatpush1.xpose.msra.mxu0 0.0
        %1315 = vmatprep.subr.mxu0 0.0
        %1316 = vmatpush1.xpose.msra.mxu0 0.0
        %1317 = vmatprep.subr.mxu0 0.0
        %1318 = vmatpush1.xpose.msra.mxu0 0.0
        %1319 = vmatprep.subr.mxu0 0.0
        %1320 = vmatpush1.xpose.msra.mxu0 0.0
        %1321 = vmatprep.subr.mxu0 0.0
        %1322 = vmatpush1.xpose.msra.mxu0 0.0
        %1323 = vmatprep.subr.mxu0 0.0
        %1324 = vmatpush1.xpose.msra.mxu0 0.0
        %1325 = vmatprep.subr.mxu0 0.0
        %1326 = vmatpush1.xpose.msra.mxu0 0.0
        %1327 = vmatprep.subr.mxu0 0.0
        %1328 = vmatpush1.xpose.msra.mxu0 0.0
        %1329 = vmatprep.subr.mxu0 0.0
        %1330 = vmatpush1.xpose.msra.mxu0 0.0
        %1331 = vmatprep.subr.mxu0 0.0
        %1332 = vmatpush1.xpose.msra.mxu0 0.0
        %1333 = vmatprep.subr.mxu0 0.0
        %1334 = vmatpush1.xpose.msra.mxu0 0.0
        %1335 = vmatprep.subr.mxu0 0.0
        %1336 = vmatpush1.xpose.msra.mxu0 0.0
        %1337 = vmatprep.subr.mxu0 0.0
        %1338 = vmatpush1.xpose.msra.mxu0 0.0
        %1339 = vmatprep.subr.mxu0 0.0
        %1340 = vmatpush1.xpose.msra.mxu0 0.0
        %1341 = vmatprep.subr.mxu0 0.0
        %1342 = vmatpush1.xpose.msra.mxu0 0.0
        %1343 = vmatprep.subr.mxu0 0.0
        %1344 = vmatpush1.xpose.msra.mxu0 0.0
        %1345 = vmatprep.subr.mxu0 0.0
        %1346 = vmatpush1.xpose.msra.mxu0 0.0
        %1347 = vmatprep.subr.mxu0 0.0
        %1348 = vmatpush1.xpose.msra.mxu0 0.0
        %1349 = vmatprep.mubr.f32.mxu0 0.0
        %1350 = vmatmul.mubr.f32.gmra.mrb[0].mxu0 %v1281
        %v1351 = vpop.f32.mrb[0].mxu0
        %v1352 = vadd.f32 0.0, %v1351
        %v1353 = vpop.f32.mrb[0].mxu0
        %1354 = vdwg.mxu0
        %v1355 = vsel %vm948, %v1352, -inf
        %1356 = vmax.xlane.f32.xlu0 %v1355
        %v1357 = vpop.xlane.xlu0 %1356
        %v1358 = vsub.f32 %v1352, %v1357
        %v1359 = vmul.f32 %v1358, 1.442695
        %v1360 = vpow.pop %v1359
        %v1361 = vsel %vm948, %v1360, 0.0
        %1362 = vadd.xlane.f32.xlu0 %v1361
        %v1363 = vpop.xlane.xlu0 %1362
        %v1364 = vrcp.pop %v1363
        %v1365 = vmul.f32 %v1360, %v1364
        %1366 = vrot.lane.b32.xlu0 %v945, 80
        %v1367 = vpop.permute.xlu0 %1366
        %v1370 = vsel %vm948, %v1365, 0
        %1372 = vmatprep.subr.mxu0 0.0
        %1373 = vmatpush1.msra.mxu0 %v1367
        %1374 = vmatprep.subr.mxu0 0.0
        %1375 = vmatpush1.msra.mxu0 0.0
        %1376 = vmatprep.subr.mxu0 0.0
        %1377 = vmatpush1.msra.mxu0 0.0
        %1378 = vmatprep.subr.mxu0 0.0
        %1379 = vmatpush1.msra.mxu0 0.0
        %1380 = vmatprep.subr.mxu0 0.0
        %1381 = vmatpush1.msra.mxu0 0.0
        %1382 = vmatprep.subr.mxu0 0.0
        %1383 = vmatpush1.msra.mxu0 0.0
        %1384 = vmatprep.subr.mxu0 0.0
        %1385 = vmatpush1.msra.mxu0 0.0
        %1386 = vmatprep.subr.mxu0 0.0
        %1387 = vmatpush1.msra.mxu0 0.0
        %1388 = vmatprep.subr.mxu0 0.0
        %1389 = vmatpush1.msra.mxu0 0.0
        %1390 = vmatprep.subr.mxu0 0.0
        %1391 = vmatpush1.msra.mxu0 0.0
        %1392 = vmatprep.subr.mxu0 0.0
        %1393 = vmatpush1.msra.mxu0 0.0
        %1394 = vmatprep.subr.mxu0 0.0
        %1395 = vmatpush1.msra.mxu0 0.0
        %1396 = vmatprep.subr.mxu0 0.0
        %1397 = vmatpush1.msra.mxu0 0.0
        %1398 = vmatprep.subr.mxu0 0.0
        %1399 = vmatpush1.msra.mxu0 0.0
        %1400 = vmatprep.subr.mxu0 0.0
        %1401 = vmatpush1.msra.mxu0 0.0
        %1402 = vmatprep.subr.mxu0 0.0
        %1403 = vmatpush1.msra.mxu0 0.0
        %1404 = vmatprep.subr.mxu0 0.0
        %1405 = vmatpush1.msra.mxu0 0.0
        %1406 = vmatprep.subr.mxu0 0.0
        %1407 = vmatpush1.msra.mxu0 0.0
        %1408 = vmatprep.subr.mxu0 0.0
        %1409 = vmatpush1.msra.mxu0 0.0
        %1410 = vmatprep.subr.mxu0 0.0
        %1411 = vmatpush1.msra.mxu0 0.0
        %1412 = vmatprep.subr.mxu0 0.0
        %1413 = vmatpush1.msra.mxu0 0.0
        %1414 = vmatprep.subr.mxu0 0.0
        %1415 = vmatpush1.msra.mxu0 0.0
        %1416 = vmatprep.subr.mxu0 0.0
        %1417 = vmatpush1.msra.mxu0 0.0
        %1418 = vmatprep.subr.mxu0 0.0
        %1419 = vmatpush1.msra.mxu0 0.0
        %1420 = vmatprep.subr.mxu0 0.0
        %1421 = vmatpush1.msra.mxu0 0.0
        %1422 = vmatprep.subr.mxu0 0.0
        %1423 = vmatpush1.msra.mxu0 0.0
        %1424 = vmatprep.subr.mxu0 0.0
        %1425 = vmatpush1.msra.mxu0 0.0
        %1426 = vmatprep.subr.mxu0 0.0
        %1427 = vmatpush1.msra.mxu0 0.0
        %1428 = vmatprep.subr.mxu0 0.0
        %1429 = vmatpush1.msra.mxu0 0.0
        %1430 = vmatprep.subr.mxu0 0.0
        %1431 = vmatpush1.msra.mxu0 0.0
        %1432 = vmatprep.subr.mxu0 0.0
        %1433 = vmatpush1.msra.mxu0 0.0
        %1434 = vmatprep.subr.mxu0 0.0
        %1435 = vmatpush1.msra.mxu0 0.0
        %1436 = vmatprep.mubr.f32.mxu0 0.0
        %1437 = vmatmul.mubr.f32.gmra.mrb[0].mxu0 %v1370
        %v1438 = vpop.f32.mrb[0].mxu0
        %v1439 = vadd.f32 0.0, %v1438
        %v1440 = vpop.f32.mrb[0].mxu0
        %1441 = vdwg.mxu0
        %1442 = vrot.lane.b32.xlu0 %v863, 104
        %v1443 = vpop.permute.xlu0 %1442
        %1444 = vrot.lane.b32.xlu0 %v945, 104
        %v1445 = vpop.permute.xlu0 %1444
        %v1446 = vsel %vm948, %v1443, 0
        %v1448 = vsel %vm948, %v1445, 0
        %1450 = vmatprep.subr.mxu0 0.0
        %1451 = vmatpush1.xpose.msra.mxu0 %v1448
        %1452 = vmatprep.subr.mxu0 0.0
        %1453 = vmatpush1.xpose.msra.mxu0 0.0
        %1454 = vmatprep.subr.mxu0 0.0
        %1455 = vmatpush1.xpose.msra.mxu0 0.0
        %1456 = vmatprep.subr.mxu0 0.0
        %1457 = vmatpush1.xpose.msra.mxu0 0.0
        %1458 = vmatprep.subr.mxu0 0.0
        %1459 = vmatpush1.xpose.msra.mxu0 0.0
        %1460 = vmatprep.subr.mxu0 0.0
        %1461 = vmatpush1.xpose.msra.mxu0 0.0
        %1462 = vmatprep.subr.mxu0 0.0
        %1463 = vmatpush1.xpose.msra.mxu0 0.0
        %1464 = vmatprep.subr.mxu0 0.0
        %1465 = vmatpush1.xpose.msra.mxu0 0.0
        %1466 = vmatprep.subr.mxu0 0.0
        %1467 = vmatpush1.xpose.msra.mxu0 0.0
        %1468 = vmatprep.subr.mxu0 0.0
        %1469 = vmatpush1.xpose.msra.mxu0 0.0
        %1470 = vmatprep.subr.mxu0 0.0
        %1471 = vmatpush1.xpose.msra.mxu0 0.0
        %1472 = vmatprep.subr.mxu0 0.0
        %1473 = vmatpush1.xpose.msra.mxu0 0.0
        %1474 = vmatprep.subr.mxu0 0.0
        %1475 = vmatpush1.xpose.msra.mxu0 0.0
        %1476 = vmatprep.subr.mxu0 0.0
        %1477 = vmatpush1.xpose.msra.mxu0 0.0
        %1478 = vmatprep.subr.mxu0 0.0
        %1479 = vmatpush1.xpose.msra.mxu0 0.0
        %1480 = vmatprep.subr.mxu0 0.0
        %1481 = vmatpush1.xpose.msra.mxu0 0.0
        %1482 = vmatprep.subr.mxu0 0.0
        %1483 = vmatpush1.xpose.msra.mxu0 0.0
        %1484 = vmatprep.subr.mxu0 0.0
        %1485 = vmatpush1.xpose.msra.mxu0 0.0
        %1486 = vmatprep.subr.mxu0 0.0
        %1487 = vmatpush1.xpose.msra.mxu0 0.0
        %1488 = vmatprep.subr.mxu0 0.0
        %1489 = vmatpush1.xpose.msra.mxu0 0.0
        %1490 = vmatprep.subr.mxu0 0.0
        %1491 = vmatpush1.xpose.msra.mxu0 0.0
        %1492 = vmatprep.subr.mxu0 0.0
        %1493 = vmatpush1.xpose.msra.mxu0 0.0
        %1494 = vmatprep.subr.mxu0 0.0
        %1495 = vmatpush1.xpose.msra.mxu0 0.0
        %1496 = vmatprep.subr.mxu0 0.0
        %1497 = vmatpush1.xpose.msra.mxu0 0.0
        %1498 = vmatprep.subr.mxu0 0.0
        %1499 = vmatpush1.xpose.msra.mxu0 0.0
        %1500 = vmatprep.subr.mxu0 0.0
        %1501 = vmatpush1.xpose.msra.mxu0 0.0
        %1502 = vmatprep.subr.mxu0 0.0
        %1503 = vmatpush1.xpose.msra.mxu0 0.0
        %1504 = vmatprep.subr.mxu0 0.0
        %1505 = vmatpush1.xpose.msra.mxu0 0.0
        %1506 = vmatprep.subr.mxu0 0.0
        %1507 = vmatpush1.xpose.msra.mxu0 0.0
        %1508 = vmatprep.subr.mxu0 0.0
        %1509 = vmatpush1.xpose.msra.mxu0 0.0
        %1510 = vmatprep.subr.mxu0 0.0
        %1511 = vmatpush1.xpose.msra.mxu0 0.0
        %1512 = vmatprep.subr.mxu0 0.0
        %1513 = vmatpush1.xpose.msra.mxu0 0.0
        %1514 = vmatprep.mubr.f32.mxu0 0.0
        %1515 = vmatmul.mubr.f32.gmra.mrb[0].mxu0 %v1446
        %v1516 = vpop.f32.mrb[0].mxu0
        %v1517 = vadd.f32 0.0, %v1516
        %v1518 = vpop.f32.mrb[0].mxu0
        %1519 = vdwg.mxu0
        %v1520 = vsel %vm948, %v1517, -inf
        %1521 = vmax.xlane.f32.xlu0 %v1520
        %v1522 = vpop.xlane.xlu0 %1521
        %v1523 = vsub.f32 %v1517, %v1522
        %v1524 = vmul.f32 %v1523, 1.442695
        %v1525 = vpow.pop %v1524
        %v1526 = vsel %vm948, %v1525, 0.0
        %1527 = vadd.xlane.f32.xlu0 %v1526
        %v1528 = vpop.xlane.xlu0 %1527
        %v1529 = vrcp.pop %v1528
        %v1530 = vmul.f32 %v1525, %v1529
        %1531 = vrot.lane.b32.xlu0 %v945, 72
        %v1532 = vpop.permute.xlu0 %1531
        %v1535 = vsel %vm948, %v1530, 0
        %1537 = vmatprep.subr.mxu0 0.0
        %1538 = vmatpush1.msra.mxu0 %v1532
        %1539 = vmatprep.subr.mxu0 0.0
        %1540 = vmatpush1.msra.mxu0 0.0
        %1541 = vmatprep.subr.mxu0 0.0
        %1542 = vmatpush1.msra.mxu0 0.0
        %1543 = vmatprep.subr.mxu0 0.0
        %1544 = vmatpush1.msra.mxu0 0.0
        %1545 = vmatprep.subr.mxu0 0.0
        %1546 = vmatpush1.msra.mxu0 0.0
        %1547 = vmatprep.subr.mxu0 0.0
        %1548 = vmatpush1.msra.mxu0 0.0
        %1549 = vmatprep.subr.mxu0 0.0
        %1550 = vmatpush1.msra.mxu0 0.0
        %1551 = vmatprep.subr.mxu0 0.0
        %1552 = vmatpush1.msra.mxu0 0.0
        %1553 = vmatprep.subr.mxu0 0.0
        %1554 = vmatpush1.msra.mxu0 0.0
        %1555 = vmatprep.subr.mxu0 0.0
        %1556 = vmatpush1.msra.mxu0 0.0
        %1557 = vmatprep.subr.mxu0 0.0
        %1558 = vmatpush1.msra.mxu0 0.0
        %1559 = vmatprep.subr.mxu0 0.0
        %1560 = vmatpush1.msra.mxu0 0.0
        %1561 = vmatprep.subr.mxu0 0.0
        %1562 = vmatpush1.msra.mxu0 0.0
        %1563 = vmatprep.subr.mxu0 0.0
        %1564 = vmatpush1.msra.mxu0 0.0
        %1565 = vmatprep.subr.mxu0 0.0
        %1566 = vmatpush1.msra.mxu0 0.0
        %1567 = vmatprep.subr.mxu0 0.0
        %1568 = vmatpush1.msra.mxu0 0.0
        %1569 = vmatprep.subr.mxu0 0.0
        %1570 = vmatpush1.msra.mxu0 0.0
        %1571 = vmatprep.subr.mxu0 0.0
        %1572 = vmatpush1.msra.mxu0 0.0
        %1573 = vmatprep.subr.mxu0 0.0
        %1574 = vmatpush1.msra.mxu0 0.0
        %1575 = vmatprep.subr.mxu0 0.0
        %1576 = vmatpush1.msra.mxu0 0.0
        %1577 = vmatprep.subr.mxu0 0.0
        %1578 = vmatpush1.msra.mxu0 0.0
        %1579 = vmatprep.subr.mxu0 0.0
        %1580 = vmatpush1.msra.mxu0 0.0
        %1581 = vmatprep.subr.mxu0 0.0
        %1582 = vmatpush1.msra.mxu0 0.0
        %1583 = vmatprep.subr.mxu0 0.0
        %1584 = vmatpush1.msra.mxu0 0.0
        %1585 = vmatprep.subr.mxu0 0.0
        %1586 = vmatpush1.msra.mxu0 0.0
        %1587 = vmatprep.subr.mxu0 0.0
        %1588 = vmatpush1.msra.mxu0 0.0
        %1589 = vmatprep.subr.mxu0 0.0
        %1590 = vmatpush1.msra.mxu0 0.0
        %1591 = vmatprep.subr.mxu0 0.0
        %1592 = vmatpush1.msra.mxu0 0.0
        %1593 = vmatprep.subr.mxu0 0.0
        %1594 = vmatpush1.msra.mxu0 0.0
        %1595 = vmatprep.subr.mxu0 0.0
        %1596 = vmatpush1.msra.mxu0 0.0
        %1597 = vmatprep.subr.mxu0 0.0
        %1598 = vmatpush1.msra.mxu0 0.0
        %1599 = vmatprep.subr.mxu0 0.0
        %1600 = vmatpush1.msra.mxu0 0.0
        %1601 = vmatprep.mubr.f32.mxu0 0.0
        %1602 = vmatmul.mubr.f32.gmra.mrb[0].mxu0 %v1535
        %v1603 = vpop.f32.mrb[0].mxu0
        %v1604 = vadd.f32 0.0, %v1603
        %v1605 = vpop.f32.mrb[0].mxu0
        %1606 = vdwg.mxu0
        %1608 = vrot.lane.b32.xlu0 %v1274, 8
        %v1609 = vpop.permute.xlu0 %1608
        %1612 = vrot.lane.b32.xlu0 %v1439, 16
        %v1613 = vpop.permute.xlu0 %1612
        %1616 = vrot.lane.b32.xlu0 %v1604, 24
        %v1617 = vpop.permute.xlu0 %1616
        %v1619 = vsel %vm948, %v1109, %v1609
        %vm1620 = vcmask 130048
        %v1621 = vsel %vm1620, %v1619, %v1613
        %vm1622 = vcmask 195584
        %v1623 = vsel %vm1622, %v1621, %v1617
        %v1624 = vld [vmem:[#allocation13] sm:$0xff]
        %v1625 = vld [vmem:[#allocation13 + $0x8] sm:$0xff]
        %v1626 = vld [vmem:[#allocation13 + $0x10] sm:$0xff]
        %v1627 = vld [vmem:[#allocation13 + $0x18] sm:$0xff]
        %v1628 = vld [vmem:[#allocation14] sm:$0x1]
        %v1630 = vlaneseq
        %v1631 = vshrl.u32 %v1630, 7
        %v1632 = vsub.s32 0, %v1631
        %v1633 = vrot.slane %v1628, %v1632
        %v1636 = vsel %vm789, %v1623, 0
        %1638 = vmatprep.subr.mxu0 0.0
        %1639 = vmatpush1.msra.mxu0 %v1624
        %1640 = vmatprep.subr.mxu0 0.0
        %1641 = vmatpush1.msra.mxu0 %v1625
        %1642 = vmatprep.subr.mxu0 0.0
        %1643 = vmatpush1.msra.mxu0 %v1626
        %1644 = vmatprep.subr.mxu0 0.0
        %1645 = vmatpush1.msra.mxu0 %v1627
        %1646 = vmatprep.subr.mxu0 0.0
        %1647 = vmatpush1.msra.mxu0 0.0
        %1648 = vmatprep.subr.mxu0 0.0
        %1649 = vmatpush1.msra.mxu0 0.0
        %1650 = vmatprep.subr.mxu0 0.0
        %1651 = vmatpush1.msra.mxu0 0.0
        %1652 = vmatprep.subr.mxu0 0.0
        %1653 = vmatpush1.msra.mxu0 0.0
        %1654 = vmatprep.subr.mxu0 0.0
        %1655 = vmatpush1.msra.mxu0 0.0
        %1656 = vmatprep.subr.mxu0 0.0
        %1657 = vmatpush1.msra.mxu0 0.0
        %1658 = vmatprep.subr.mxu0 0.0
        %1659 = vmatpush1.msra.mxu0 0.0
        %1660 = vmatprep.subr.mxu0 0.0
        %1661 = vmatpush1.msra.mxu0 0.0
        %1662 = vmatprep.subr.mxu0 0.0
        %1663 = vmatpush1.msra.mxu0 0.0
        %1664 = vmatprep.subr.mxu0 0.0
        %1665 = vmatpush1.msra.mxu0 0.0
        %1666 = vmatprep.subr.mxu0 0.0
        %1667 = vmatpush1.msra.mxu0 0.0
        %1668 = vmatprep.subr.mxu0 0.0
        %1669 = vmatpush1.msra.mxu0 0.0
        %1670 = vmatprep.subr.mxu0 0.0
        %1671 = vmatpush1.msra.mxu0 0.0
        %1672 = vmatprep.subr.mxu0 0.0
        %1673 = vmatpush1.msra.mxu0 0.0
        %1674 = vmatprep.subr.mxu0 0.0
        %1675 = vmatpush1.msra.mxu0 0.0
        %1676 = vmatprep.subr.mxu0 0.0
        %1677 = vmatpush1.msra.mxu0 0.0
        %1678 = vmatprep.subr.mxu0 0.0
        %1679 = vmatpush1.msra.mxu0 0.0
        %1680 = vmatprep.subr.mxu0 0.0
        %1681 = vmatpush1.msra.mxu0 0.0
        %1682 = vmatprep.subr.mxu0 0.0
        %1683 = vmatpush1.msra.mxu0 0.0
        %1684 = vmatprep.subr.mxu0 0.0
        %1685 = vmatpush1.msra.mxu0 0.0
        %1686 = vmatprep.subr.mxu0 0.0
        %1687 = vmatpush1.msra.mxu0 0.0
        %1688 = vmatprep.subr.mxu0 0.0
        %1689 = vmatpush1.msra.mxu0 0.0
        %1690 = vmatprep.subr.mxu0 0.0
        %1691 = vmatpush1.msra.mxu0 0.0
        %1692 = vmatprep.subr.mxu0 0.0
        %1693 = vmatpush1.msra.mxu0 0.0
        %1694 = vmatprep.subr.mxu0 0.0
        %1695 = vmatpush1.msra.mxu0 0.0
        %1696 = vmatprep.subr.mxu0 0.0
        %1697 = vmatpush1.msra.mxu0 0.0
        %1698 = vmatprep.subr.mxu0 0.0
        %1699 = vmatpush1.msra.mxu0 0.0
        %1700 = vmatprep.subr.mxu0 0.0
        %1701 = vmatpush1.msra.mxu0 0.0
        %1702 = vmatprep.mubr.f32.mxu0 0.0
        %1703 = vmatmul.mubr.f32.gmra.mrb[0].mxu0 %v1636
        %v1704 = vpop.f32.mrb[0].mxu0
        %v1705 = vadd.f32 %v1633, %v1704
        %v1706 = vpop.f32.mrb[0].mxu0
        %1707 = vdwg.mxu0
        %v1708 = vadd.f32 %v776, %v1705
        %v1709 = vsel %vm789, %v1708, 0.0
        %1710 = vadd.xlane.f32.xlu0 %v1709
        %v1711 = vpop.xlane.xlu0 %1710
        %v1712 = vrcp.pop 32.0
        %v1713 = vmul.f32 %v1711, %v1712
        %v1714 = vsub.f32 %v1708, %v1713
        %v1715 = vmul.f32 %v1714, %v1714
        %v1716 = vsel %vm789, %v1715, 0.0
        %1717 = vadd.xlane.f32.xlu0 %v1716
        %v1718 = vpop.xlane.xlu0 %1717
        %v1719 = vmul.f32 %v1718, %v1712
        %v1720 = vadd.f32 %v1719, 1e-05
        %v1721 = vrsqrt.pop %v1720
        %v1722 = vmul.f32 %v1714, %v1721
        %v1723 = vld [vmem:[#allocation16] sm:$0x1]
        %v1725 = vlaneseq
        %v1726 = vshrl.u32 %v1725, 7
        %v1727 = vsub.s32 0, %v1726
        %v1728 = vrot.slane %v1723, %v1727
        %v1730 = vmul.f32 %v1722, %v1728
        %v1731 = vld [vmem:[#allocation17] sm:$0x1]
        %v1733 = vlaneseq
        %v1734 = vshrl.u32 %v1733, 7
        %v1735 = vsub.s32 0, %v1734
        %v1736 = vrot.slane %v1731, %v1735
        %v1738 = vadd.f32 %v1730, %v1736
        %v1739 = vld [vmem:[#allocation19] sm:$0xff]
        %v1740 = vld [vmem:[#allocation19 + $0x8] sm:$0xff]
        %v1741 = vld [vmem:[#allocation19 + $0x10] sm:$0xff]
        %v1742 = vld [vmem:[#allocation19 + $0x18] sm:$0xff]
        %v1743 = vld [vmem:[#allocation20] sm:$0x1]
        %v1745 = vlaneseq
        %v1746 = vshrl.u32 %v1745, 7
        %v1747 = vsub.s32 0, %v1746
        %v1748 = vrot.slane %v1743, %v1747
        %v1751 = vsel %vm789, %v1738, 0
        %1753 = vmatprep.subr.mxu0 0.0
        %1754 = vmatpush1.msra.mxu0 %v1739
        %1755 = vmatprep.subr.mxu0 0.0
        %1756 = vmatpush1.msra.mxu0 %v1740
        %1757 = vmatprep.subr.mxu0 0.0
        %1758 = vmatpush1.msra.mxu0 %v1741
        %1759 = vmatprep.subr.mxu0 0.0
        %1760 = vmatpush1.msra.mxu0 %v1742
        %1761 = vmatprep.subr.mxu0 0.0
        %1762 = vmatpush1.msra.mxu0 0.0
        %1763 = vmatprep.subr.mxu0 0.0
        %1764 = vmatpush1.msra.mxu0 0.0
        %1765 = vmatprep.subr.mxu0 0.0
        %1766 = vmatpush1.msra.mxu0 0.0
        %1767 = vmatprep.subr.mxu0 0.0
        %1768 = vmatpush1.msra.mxu0 0.0
        %1769 = vmatprep.subr.mxu0 0.0
        %1770 = vmatpush1.msra.mxu0 0.0
        %1771 = vmatprep.subr.mxu0 0.0
        %1772 = vmatpush1.msra.mxu0 0.0
        %1773 = vmatprep.subr.mxu0 0.0
        %1774 = vmatpush1.msra.mxu0 0.0
        %1775 = vmatprep.subr.mxu0 0.0
        %1776 = vmatpush1.msra.mxu0 0.0
        %1777 = vmatprep.subr.mxu0 0.0
        %1778 = vmatpush1.msra.mxu0 0.0
        %1779 = vmatprep.subr.mxu0 0.0
        %1780 = vmatpush1.msra.mxu0 0.0
        %1781 = vmatprep.subr.mxu0 0.0
        %1782 = vmatpush1.msra.mxu0 0.0
        %1783 = vmatprep.subr.mxu0 0.0
        %1784 = vmatpush1.msra.mxu0 0.0
        %1785 = vmatprep.subr.mxu0 0.0
        %1786 = vmatpush1.msra.mxu0 0.0
        %1787 = vmatprep.subr.mxu0 0.0
        %1788 = vmatpush1.msra.mxu0 0.0
        %1789 = vmatprep.subr.mxu0 0.0
        %1790 = vmatpush1.msra.mxu0 0.0
        %1791 = vmatprep.subr.mxu0 0.0
        %1792 = vmatpush1.msra.mxu0 0.0
        %1793 = vmatprep.subr.mxu0 0.0
        %1794 = vmatpush1.msra.mxu0 0.0
        %1795 = vmatprep.subr.mxu0 0.0
        %1796 = vmatpush1.msra.mxu0 0.0
        %1797 = vmatprep.subr.mxu0 0.0
        %1798 = vmatpush1.msra.mxu0 0.0
        %1799 = vmatprep.subr.mxu0 0.0
        %1800 = vmatpush1.msra.mxu0 0.0
        %1801 = vmatprep.subr.mxu0 0.0
        %1802 = vmatpush1.msra.mxu0 0.0
        %1803 = vmatprep.subr.mxu0 0.0
        %1804 = vmatpush1.msra.mxu0 0.0
        %1805 = vmatprep.subr.mxu0 0.0
        %1806 = vmatpush1.msra.mxu0 0.0
        %1807 = vmatprep.subr.mxu0 0.0
        %1808 = vmatpush1.msra.mxu0 0.0
        %1809 = vmatprep.subr.mxu0 0.0
        %1810 = vmatpush1.msra.mxu0 0.0
        %1811 = vmatprep.subr.mxu0 0.0
        %1812 = vmatpush1.msra.mxu0 0.0
        %1813 = vmatprep.subr.mxu0 0.0
        %1814 = vmatpush1.msra.mxu0 0.0
        %1815 = vmatprep.subr.mxu0 0.0
        %1816 = vmatpush1.msra.mxu0 0.0
        %1817 = vmatprep.mubr.f32.mxu0 0.0
        %1818 = vmatmul.mubr.f32.gmra.mrb[0].mxu0 %v1751
        %v1819 = vpop.f32.mrb[0].mxu0
        %v1820 = vadd.f32 %v1748, %v1819
        %v1821 = vpop.f32.mrb[0].mxu0
        %1822 = vdwg.mxu0
        %v1823 = vmax.f32 %v1820, 0.0
        %v1824 = vld [vmem:[#allocation22] sm:$0xff]
        %v1825 = vld [vmem:[#allocation22 + $0x8] sm:$0xff]
        %v1826 = vld [vmem:[#allocation22 + $0x10] sm:$0xff]
        %v1827 = vld [vmem:[#allocation22 + $0x18] sm:$0xff]
        %v1828 = vld [vmem:[#allocation22 + $0x20] sm:$0xff]
        %v1829 = vld [vmem:[#allocation22 + $0x28] sm:$0xff]
        %v1830 = vld [vmem:[#allocation22 + $0x30] sm:$0xff]
        %v1831 = vld [vmem:[#allocation22 + $0x38] sm:$0xff]
        %v1832 = vld [vmem:[#allocation23] sm:$0x1]
        %v1834 = vlaneseq
        %v1835 = vshrl.u32 %v1834, 7
        %v1836 = vsub.s32 0, %v1835
        %v1837 = vrot.slane %v1832, %v1836
        %vm1839 = vcmask 523264
        %v1841 = vsel %vm1839, %v1823, 0
        %1843 = vmatprep.subr.mxu0 0.0
        %1844 = vmatpush1.msra.mxu0 %v1824
        %1845 = vmatprep.subr.mxu0 0.0
        %1846 = vmatpush1.msra.mxu0 %v1825
        %1847 = vmatprep.subr.mxu0 0.0
        %1848 = vmatpush1.msra.mxu0 %v1826
        %1849 = vmatprep.subr.mxu0 0.0
        %1850 = vmatpush1.msra.mxu0 %v1827
        %1851 = vmatprep.subr.mxu0 0.0
        %1852 = vmatpush1.msra.mxu0 %v1828
        %1853 = vmatprep.subr.mxu0 0.0
        %1854 = vmatpush1.msra.mxu0 %v1829
        %1855 = vmatprep.subr.mxu0 0.0
        %1856 = vmatpush1.msra.mxu0 %v1830
        %1857 = vmatprep.subr.mxu0 0.0
        %1858 = vmatpush1.msra.mxu0 %v1831
        %1859 = vmatprep.subr.mxu0 0.0
        %1860 = vmatpush1.msra.mxu0 0.0
        %1861 = vmatprep.subr.mxu0 0.0
        %1862 = vmatpush1.msra.mxu0 0.0
        %1863 = vmatprep.subr.mxu0 0.0
        %1864 = vmatpush1.msra.mxu0 0.0
        %1865 = vmatprep.subr.mxu0 0.0
        %1866 = vmatpush1.msra.mxu0 0.0
        %1867 = vmatprep.subr.mxu0 0.0
        %1868 = vmatpush1.msra.mxu0 0.0
        %1869 = vmatprep.subr.mxu0 0.0
        %1870 = vmatpush1.msra.mxu0 0.0
        %1871 = vmatprep.subr.mxu0 0.0
        %1872 = vmatpush1.msra.mxu0 0.0
        %1873 = vmatprep.subr.mxu0 0.0
        %1874 = vmatpush1.msra.mxu0 0.0
        %1875 = vmatprep.subr.mxu0 0.0
        %1876 = vmatpush1.msra.mxu0 0.0
        %1877 = vmatprep.subr.mxu0 0.0
        %1878 = vmatpush1.msra.mxu0 0.0
        %1879 = vmatprep.subr.mxu0 0.0
        %1880 = vmatpush1.msra.mxu0 0.0
        %1881 = vmatprep.subr.mxu0 0.0
        %1882 = vmatpush1.msra.mxu0 0.0
        %1883 = vmatprep.subr.mxu0 0.0
        %1884 = vmatpush1.msra.mxu0 0.0
        %1885 = vmatprep.subr.mxu0 0.0
        %1886 = vmatpush1.msra.mxu0 0.0
        %1887 = vmatprep.subr.mxu0 0.0
        %1888 = vmatpush1.msra.mxu0 0.0
        %1889 = vmatprep.subr.mxu0 0.0
        %1890 = vmatpush1.msra.mxu0 0.0
        %1891 = vmatprep.subr.mxu0 0.0
        %1892 = vmatpush1.msra.mxu0 0.0
        %1893 = vmatprep.subr.mxu0 0.0
        %1894 = vmatpush1.msra.mxu0 0.0
        %1895 = vmatprep.subr.mxu0 0.0
        %1896 = vmatpush1.msra.mxu0 0.0
        %1897 = vmatprep.subr.mxu0 0.0
        %1898 = vmatpush1.msra.mxu0 0.0
        %1899 = vmatprep.subr.mxu0 0.0
        %1900 = vmatpush1.msra.mxu0 0.0
        %1901 = vmatprep.subr.mxu0 0.0
        %1902 = vmatpush1.msra.mxu0 0.0
        %1903 = vmatprep.subr.mxu0 0.0
        %1904 = vmatpush1.msra.mxu0 0.0
        %1905 = vmatprep.subr.mxu0 0.0
        %1906 = vmatpush1.msra.mxu0 0.0
        %1907 = vmatprep.mubr.f32.mxu0 0.0
        %1908 = vmatmul.mubr.f32.gmra.mrb[0].mxu0 %v1841
        %v1909 = vpop.f32.mrb[0].mxu0
        %v1910 = vadd.f32 %v1837, %v1909
        %v1911 = vpop.f32.mrb[0].mxu0
        %1912 = vdwg.mxu0
        %v1913 = vadd.f32 %v1738, %v1910
        %v1914 = vsel %vm789, %v1913, 0.0
        %1915 = vadd.xlane.f32.xlu0 %v1914
        %v1916 = vpop.xlane.xlu0 %1915
        %v1917 = vmul.f32 %v1916, %v1712
        %v1918 = vsub.f32 %v1913, %v1917
        %v1919 = vmul.f32 %v1918, %v1918
        %v1920 = vsel %vm789, %v1919, 0.0
        %1921 = vadd.xlane.f32.xlu0 %v1920
        %v1922 = vpop.xlane.xlu0 %1921
        %v1923 = vmul.f32 %v1922, %v1712
        %v1924 = vadd.f32 %v1923, 1e-05
        %v1925 = vrsqrt.pop %v1924
        %v1926 = vmul.f32 %v1918, %v1925
        %v1927 = vld [vmem:[#allocation25] sm:$0x1]
        %v1929 = vlaneseq
        %v1930 = vshrl.u32 %v1929, 7
        %v1931 = vsub.s32 0, %v1930
        %v1932 = vrot.slane %v1927, %v1931
        %v1934 = vmul.f32 %v1926, %v1932
        %v1935 = vld [vmem:[#allocation26] sm:$0x1]
        %v1937 = vlaneseq
        %v1938 = vshrl.u32 %v1937, 7
        %v1939 = vsub.s32 0, %v1938
        %v1940 = vrot.slane %v1935, %v1939
        %v1942 = vadd.f32 %v1934, %v1940
        %1943 = vst.msk [vmem:[%s775] sm:$0xff] %vm789, %v1942
        %s1944 = sand.u32 %s413, 1
        %s1945 = scalar_lea.sflag [#allocation4], %s1944
        %s1946 = sand.u32 %s413, 1
        %s1947 = smul.addr %s1946, 8
        %s1948 = scalar_lea.vmem [#allocation28], %s1947
        // Predicated region
        $region149: #{tpu_custom_call.1} parent=83 // pred_check
          %p1949 = pneg %p423
        $region150: #{tpu_custom_call.1} parent=83 // pred_check_branch
          %1951 = sbr.rel (%p1949) target = $region152
        $region151: #{tpu_custom_call.1} parent=83 // pred_region
          %s1953 = ssub.s32 128, 128
          %1954 = vsyncadd %s1945, %s1953
          %s1955 = sadd.s32 %s48, %s47
          %s1956 = smul.addr %s1955, 128
          %s1957 = scalar_lea.hbm %s16, %s1956
          %s1959 = sshll.u32 %s1948, 4
          %s1960 = int_to_ptr.vmem [resolvable:$true] %s1959
          %1962 = dma.vmem_to_hbm [thread:$0]  %s1960, 128, %s1957, %s1945
        $region152: #{tpu_custom_call.1} parent=83 // pred_fallthru
          _
      $region84: #{tpu_custom_call.1} parent=5 // pred_fallthru
        _
      %p1963 = scmp.le.s32.totalorder 2, %s38
      // Predicated region
      $region153: #{tpu_custom_call.1} parent=5 // pred_check
        %p1964 = pneg %p1963
      $region154: #{tpu_custom_call.1} parent=5 // pred_check_branch
        %1966 = sbr.rel (%p1964) target = $region156
      $region155: #{tpu_custom_call.1} parent=5 // pred_region
        %s1967 = ssub.s32 %s38, 2
        // Predicated region
        $region157: #{tpu_custom_call.1} parent=155 // pred_check
          %p1968 = pneg %p429
        $region158: #{tpu_custom_call.1} parent=155 // pred_check_branch
          %1970 = sbr.rel (%p1968) target = $region160
        $region159: #{tpu_custom_call.1} parent=155 // pred_region
          %s1971 = sand.u32 %s414, 1
          %s1972 = scalar_lea.sflag [#allocation4], %s1971
          %s1973 = sand.u32 %s414, 1
          %s1974 = smul.addr %s1973, 8
          %s1975 = scalar_lea.vmem [#allocation28], %s1974
          %1976 = dma.done %s1972, 128
        $region160: #{tpu_custom_call.1} parent=155 // pred_fallthru
          _
      $region156: #{tpu_custom_call.1} parent=5 // pred_fallthru
        _
    $region6: #{tpu_custom_call.1} parent=1 // loop_footer
      %s42 = sadd.s32 1, %s38
    $region7: #{tpu_custom_call.1} parent=1 // loop_footer_branch
      %37 = sbr.rel target = $region3
    $region8: #{tpu_custom_call.1} parent=1 // loop_exit
      _
    %1977 = vsyncpa [#allocation3], 1
    %s1978 = scalar_lea.sflag [#allocation3], 1
    %1979 = vsyncpa %s1978, 1
    %1980 = vsyncpa [#allocation6], 1
    %s1981 = scalar_lea.sflag [#allocation6], 1
    %1982 = vsyncpa %s1981, 1
    %1983 = vsyncpa [#allocation9], 1
    %1984 = vsyncpa [#allocation12], 1
    %1985 = vsyncpa [#allocation15], 1
    %1986 = vsyncpa [#allocation18], 1
    %1987 = vsyncpa [#allocation21], 1
    %1988 = vsyncpa [#allocation24], 1
    %1989 = vsyncpa [#allocation27], 1
    %1990 = vsyncpa [#allocation4], 1
    %s1991 = scalar_lea.sflag [#allocation4], 1
    %1992 = vsyncpa %s1991, 1

</llo_original>
